<compile_context>
chip_gen: v7x
topology: tpu7x:2x2x1
jax: 0.10.0
libtpu: 0.0.40
codegen_flags: <defaults>
</compile_context>

<pallas_src>
import jax
import jax.numpy as jnp
from jax.experimental import pallas as pl
from jax.experimental.pallas import tpu as pltpu


def _round_up(n, m):
    return ((n + m - 1) // m) * m


def _lane_pad(n):
    # 128-lane minimum; feed the full 256-wide MXU granule (v6e/v7x) once the
    # feature dim exceeds 128.  256 is also a multiple of 128, so v5e is fine.
    return _round_up(n, 128) if n <= 128 else _round_up(n, 256)


def mlp_kernel(x_ref, w_in_ref, b_in_ref, w_hid_ref, b_hid_ref,
               w_out_ref, b_out_ref, o_ref, h_ref):
    """One (batch-tile, layer-step) grid point.

    Grid = (num_batch_tiles, num_layers + 1); layer axis is "arbitrary".
      l == 0        : h = x @ w_in + b_in
      l >= 1        : h = relu(h) @ w_hid[l-1] + b_hid[l-1]   (streamed block)
      l == last     : o = h @ w_out + b_out

    x_ref     : (TB, in_pad)         bf16
    w_in_ref  : (in_pad, hid_pad)    bf16   (Buffered(1))
    b_in_ref  : (1, hid_pad)         f32    (Buffered(1))
    w_hid_ref : (1, hid_pad, hid_pad) bf16  (streamed per layer)
    b_hid_ref : (1, 1, hid_pad)      f32    (streamed per layer)
    w_out_ref : (hid_pad, out_pad)   bf16   (Buffered(1))
    b_out_ref : (1, out_pad)         f32    (Buffered(1))
    o_ref     : (TB, out_pad)        f32
    h_ref     : (TB, hid_pad)        f32 scratch, carried across layer axis
    """
    l = pl.program_id(1)
    last = pl.num_programs(1) - 1

    @pl.when(l == 0)
    def _():
        h_ref[...] = (jnp.dot(x_ref[...], w_in_ref[...],
                              preferred_element_type=jnp.float32)
                      + b_in_ref[...])

    @pl.when(l > 0)
    def _():
        # TODO(synk): nn.Dropout is identity (eval mode); torch's training-mode
        # RNG stream has no reproducible Pallas equivalent.
        h = jnp.maximum(h_ref[...], 0.0)                         # ReLU
        h_ref[...] = (jnp.dot(h.astype(w_hid_ref.dtype), w_hid_ref[0],
                              preferred_element_type=jnp.float32)
                      + b_hid_ref[0])

    @pl.when(l == last)
    def _():
        h = h_ref[...]
        # TODO(synk): for num_outputs << 128 and huge B, a lane-dense packed
        # output layout would avoid writing out_pad/num_outputs padding back
        # to HBM; negligible at these sizes.
        o_ref[...] = (jnp.dot(h.astype(w_out_ref.dtype), w_out_ref[...],
                              preferred_element_type=jnp.float32)
                      + b_out_ref[...]).astype(o_ref.dtype)


def init_params(key, num_tokens, num_outputs, num_hid, num_layers, max_len):
    """f32, unpadded, torch-equivalent parameters (weights stored (in, out))."""
    ks = jax.random.split(key, 8)
    in_features = num_tokens * max_len
    # nn.Embedding(num_tokens, num_tokens), normal(0, num_tokens**-0.5)
    emb = jax.random.normal(ks[0], (num_tokens, num_tokens),
                            jnp.float32) * (num_tokens ** -0.5)

    def linear(kw, kb, fan_in, fan_out):
        bound = 1.0 / jnp.sqrt(fan_in)
        w = jax.random.uniform(kw, (fan_in, fan_out), jnp.float32, -bound, bound)
        b = jax.random.uniform(kb, (1, fan_out), jnp.float32, -bound, bound)
        return w, b

    w_in, b_in = linear(ks[1], ks[2], in_features, num_hid)
    if num_layers > 0:
        hk = jax.random.split(ks[3], 2 * num_layers)
        ws, bs = [], []
        for l in range(num_layers):
            w, b = linear(hk[2 * l], hk[2 * l + 1], num_hid, num_hid)
            ws.append(w)
            bs.append(b[None])                    # (1, 1, num_hid)
        w_hid = jnp.stack(ws, 0)                  # (L, num_hid, num_hid)
        b_hid = jnp.concatenate(bs, 0)            # (L, 1, num_hid)
    else:
        w_hid = jnp.zeros((0, num_hid, num_hid), jnp.float32)
        b_hid = jnp.zeros((0, 1, num_hid), jnp.float32)
    w_out, b_out = linear(ks[4], ks[5], num_hid, num_outputs)
    return dict(emb=emb, w_in=w_in, b_in=b_in, w_hid=w_hid, b_hid=b_hid,
                w_out=w_out, b_out=b_out)


def pack_params(params, num_tokens, num_outputs, num_hid, num_layers, max_len,
                weight_dtype=jnp.bfloat16):
    """Zero-pad feature dims to MXU-friendly lane multiples; weights -> bf16."""
    in_features = num_tokens * max_len
    in_pad = _lane_pad(in_features)
    hid_pad = _lane_pad(num_hid)
    out_pad = _lane_pad(num_outputs)
    lp = max(num_layers, 1)

    def pad2(a, r, c, dt):
        out = jnp.zeros((r, c), dt)
        return out.at[:a.shape[0], :a.shape[1]].set(a.astype(dt))

    w_in = pad2(params["w_in"], in_pad, hid_pad, weight_dtype)
    b_in = pad2(params["b_in"], 1, hid_pad, jnp.float32)
    w_out = pad2(params["w_out"], hid_pad, out_pad, weight_dtype)
    b_out = pad2(params["b_out"], 1, out_pad, jnp.float32)
    w_hid = jnp.zeros((lp, hid_pad, hid_pad), weight_dtype)
    b_hid = jnp.zeros((lp, 1, hid_pad), jnp.float32)
    if num_layers > 0:
        w_hid = w_hid.at[:num_layers, :num_hid, :num_hid].set(
            params["w_hid"].astype(weight_dtype))
        b_hid = b_hid.at[:num_layers, :, :num_hid].set(
            params["b_hid"].astype(jnp.float32))
    meta = dict(num_layers=num_layers, num_outputs=num_outputs,
                in_features=in_features, in_pad=in_pad,
                hid_pad=hid_pad, out_pad=out_pad, lp=lp)
    # Embedding table stored in bf16 so the gather reads half the bytes and the
    # gathered activations are already in the kernel's input dtype.
    return dict(emb=params["emb"].astype(jnp.bfloat16),
                w_in=w_in, b_in=b_in, w_hid=w_hid, b_hid=b_hid,
                w_out=w_out, b_out=b_out, meta=meta)


def _choose_batch_tile(batch, batch_tile):
    tb = min(batch_tile, _round_up(batch, 16))           # bf16 sublane packing
    # Guarantee >= 2 grid steps on the "parallel" batch axis when the batch is
    # big enough, so both v7x TensorCores get work.
    if batch > 16 and _round_up(batch, tb) // tb < 2:
        tb = _round_up(-(-batch // 2), 16)
    b_pad = _round_up(batch, tb)
    return tb, b_pad


def _vmem_limit_bytes(tb, in_pad, hid_pad, out_pad):
    wbytes = 2   # bf16 weights
    weights = (in_pad * hid_pad * wbytes              # w_in  (single buffer)
               + 2 * hid_pad * hid_pad * wbytes       # w_hid (1 layer, 2 bufs)
               + hid_pad * out_pad * wbytes)          # w_out (single buffer)
    biases = (4 * hid_pad + out_pad) * 4
    acts = (2 * tb * in_pad * 2                       # x tile, 2 bufs, bf16
            + 2 * tb * out_pad * 4                    # out tile, 2 bufs, f32
            + tb * hid_pad * 4)                       # h scratch, f32
    needed = weights + biases + acts
    # Headroom, floored at 32 MiB, capped at v7x's 64 MiB physical VMEM.
    return min(max(int(1.5 * needed) + (4 << 20), 32 << 20), 64 << 20)


def mlp_forward(tokens, packed, *, batch_tile=512):
    meta = packed["meta"]
    num_layers = meta["num_layers"]
    num_outputs = meta["num_outputs"]
    in_pad, hid_pad, out_pad = meta["in_pad"], meta["hid_pad"], meta["out_pad"]

    # Embedding lookup + flatten (glue; matches torch x.reshape(B, -1)).
    x = packed["emb"][tokens]                         # (B, max_len, T) bf16
    B = x.shape[0]
    x = x.reshape(B, -1)                              # (B, in_features) bf16

    tb, b_pad = _choose_batch_tile(B, batch_tile)
    xp = jnp.pad(x, ((0, b_pad - B), (0, in_pad - x.shape[1])))

    nb = b_pad // tb
    nl = num_layers + 1                               # layer grid axis
    vmem_limit = _vmem_limit_bytes(tb, in_pad, hid_pad, out_pad)

    def build(weight_mode):
        wkw = {} if weight_mode is None else dict(pipeline_mode=weight_mode)
        return pl.pallas_call(
            mlp_kernel,
            out_shape=jax.ShapeDtypeStruct((b_pad, out_pad), jnp.float32),
            grid=(nb, nl),
            in_specs=[
                pl.BlockSpec((tb, in_pad), lambda i, l: (i, 0)),       # x
                pl.BlockSpec((in_pad, hid_pad), lambda i, l: (0, 0), **wkw),
                pl.BlockSpec((1, hid_pad), lambda i, l: (0, 0), **wkw),
                pl.BlockSpec((1, hid_pad, hid_pad),                    # w_hid
                             lambda i, l: (jnp.maximum(l - 1, 0), 0, 0)),
                pl.BlockSpec((1, 1, hid_pad),                          # b_hid
                             lambda i, l: (jnp.maximum(l - 1, 0), 0, 0)),
                pl.BlockSpec((hid_pad, out_pad), lambda i, l: (0, 0), **wkw),
                pl.BlockSpec((1, out_pad), lambda i, l: (0, 0), **wkw),
            ],
            out_specs=pl.BlockSpec((tb, out_pad), lambda i, l: (i, 0)),
            scratch_shapes=[pltpu.VMEM((tb, hid_pad), jnp.float32)],
            compiler_params=pltpu.CompilerParams(
                dimension_semantics=("parallel", "arbitrary"),
                vmem_limit_bytes=vmem_limit),
        )

    args = (xp, packed["w_in"], packed["b_in"], packed["w_hid"],
            packed["b_hid"], packed["w_out"], packed["b_out"])
    try:
        out = build(pl.Buffered(1))(*args)            # single-buffer weights
    except Exception:
        # TODO(synk): pl.Buffered(1) not accepted by this jax build; fall back
        # to default double-buffered weights (costs VMEM only, not semantics).
        out = build(None)(*args)

    # Strip padding, then match torch's out.reshape(-1).
    return out[:B, :num_outputs].reshape(-1)


if __name__ == "__main__":
    num_tokens, num_outputs, num_hid, num_layers, max_len = 4, 1, 32, 2, 8
    batch = 2

    key = jax.random.PRNGKey(0)
    kp, kx = jax.random.split(key)
    params = init_params(kp, num_tokens, num_outputs, num_hid, num_layers, max_len)
    packed = pack_params(params, num_tokens, num_outputs, num_hid, num_layers,
                         max_len)
    tokens = jax.random.randint(kx, (batch, max_len), 0, num_tokens, jnp.int32)

    out = mlp_forward(tokens, packed)
    out = jax.block_until_ready(out)
    assert out.shape == (batch * num_outputs,)

    # Reference 1: same bf16-weight / f32-accumulate arithmetic as the kernel.
    def ref_bf16(tokens, p, wdt=jnp.bfloat16):
        x = p["emb"][tokens].reshape(tokens.shape[0], -1)
        h = jnp.dot(x.astype(wdt), p["w_in"].astype(wdt),
                    preferred_element_type=jnp.float32) + p["b_in"]
        for l in range(num_layers):
            h = jnp.maximum(h, 0.0)
            h = jnp.dot(h.astype(wdt), p["w_hid"][l].astype(wdt),
                        preferred_element_type=jnp.float32) + p["b_hid"][l]
        h = jnp.dot(h.astype(wdt), p["w_out"].astype(wdt),
                    preferred_element_type=jnp.float32) + p["b_out"]
        return h.reshape(-1)

    # Reference 2: full f32 math (original module precision).
    def ref_f32(tokens, p):
        x = p["emb"][tokens].reshape(tokens.shape[0], -1)
        h = x @ p["w_in"] + p["b_in"]
        for l in range(num_layers):
            h = jnp.maximum(h, 0.0)
            h = h @ p["w_hid"][l] + p["b_hid"][l]
        return (h @ p["w_out"] + p["b_out"]).reshape(-1)

    exp_bf16 = ref_bf16(tokens, params)
    exp_f32 = ref_f32(tokens, params)
    assert jnp.allclose(out, exp_bf16, atol=1e-3, rtol=1e-3), (out, exp_bf16)
    assert jnp.allclose(out, exp_f32, atol=5e-2, rtol=5e-2), (out, exp_f32)
    print("KERNEL_OK")
</pallas_src>

<mosaic_0001>
module attributes {stable_mosaic.version = 11 : i64} {
  func.func @mlp_kernel(%arg0: i32, %arg1: i32, %arg2: memref<16x128xbf16, #tpu.memory_space<vmem>>, %arg3: memref<128x128xbf16, #tpu.memory_space<vmem>>, %arg4: memref<1x128xf32, #tpu.memory_space<vmem>>, %arg5: memref<1x128x128xbf16, #tpu.memory_space<vmem>>, %arg6: memref<1x1x128xf32, #tpu.memory_space<vmem>>, %arg7: memref<128x128xbf16, #tpu.memory_space<vmem>>, %arg8: memref<1x128xf32, #tpu.memory_space<vmem>>, %arg9: memref<16x128xf32, #tpu.memory_space<vmem>>, %arg10: memref<16x128xf32, #tpu.memory_space<vmem>>) attributes {dimension_semantics = [#tpu.dimension_semantics<parallel>, #tpu.dimension_semantics<arbitrary>], iteration_bounds = array<i64: 1, 3>, scalar_prefetch = 0 : i64, scratch_operands = 1 : i64, tpu.core_type = #tpu.core_type<tc>, window_params = [{transform_indices = @transform_0, window_bounds = array<i64: 16, 128>}, {pipeline_mode = #tpu.pipeline_mode<synchronous>, transform_indices = @transform_1, window_bounds = array<i64: 128, 128>}, {pipeline_mode = #tpu.pipeline_mode<synchronous>, transform_indices = @transform_2, window_bounds = array<i64: 1, 128>}, {transform_indices = @transform_3, window_bounds = array<i64: 1, 128, 128>}, {transform_indices = @transform_4, window_bounds = array<i64: 1, 1, 128>}, {pipeline_mode = #tpu.pipeline_mode<synchronous>, transform_indices = @transform_5, window_bounds = array<i64: 128, 128>}, {pipeline_mode = #tpu.pipeline_mode<synchronous>, transform_indices = @transform_6, window_bounds = array<i64: 1, 128>}, {transform_indices = @transform_7, window_bounds = array<i64: 16, 128>}]} {
    %c0_i32 = arith.constant 0 : i32
    %0 = arith.cmpi eq, %arg1, %c0_i32 : i32
    %1 = arith.extui %0 : i1 to i32
    %c0_i32_0 = arith.constant 0 : i32
    %2 = arith.cmpi ne, %1, %c0_i32_0 : i32
    scf.if %2 {
      %c0 = arith.constant 0 : index
      %c0_4 = arith.constant 0 : index
      %9 = vector.load %arg2[%c0, %c0_4] : memref<16x128xbf16, #tpu.memory_space<vmem>>, vector<16x128xbf16>
      %c0_5 = arith.constant 0 : index
      %c0_6 = arith.constant 0 : index
      %10 = vector.load %arg3[%c0_5, %c0_6] : memref<128x128xbf16, #tpu.memory_space<vmem>>, vector<128x128xbf16>
      %cst = arith.constant dense<0.000000e+00> : vector<16x128xf32>
      %11 = tpu.matmul %9, %10, %cst {dimension_numbers = #tpu.dot_dimension_numbers<[1], [0], [0], [1], [0, 0, 1, 1], [], []>} : vector<16x128xbf16>, vector<128x128xbf16>, vector<16x128xf32> -> vector<16x128xf32>
      %c0_7 = arith.constant 0 : index
      %c0_8 = arith.constant 0 : index
      %12 = vector.load %arg4[%c0_7, %c0_8] : memref<1x128xf32, #tpu.memory_space<vmem>>, vector<1x128xf32>
      %13 = vector.broadcast %12 : vector<1x128xf32> to vector<16x128xf32>
      %14 = arith.addf %11, %13 : vector<16x128xf32>
      %c0_9 = arith.constant 0 : index
      %c0_10 = arith.constant 0 : index
      %15 = vector.load %arg10[%c0_9, %c0_10] : memref<16x128xf32, #tpu.memory_space<vmem>>, vector<16x128xf32>
      tpu.vector_store %arg10[%c0_9, %c0_10], %14 {strides = array<i32>} : memref<16x128xf32, #tpu.memory_space<vmem>>, vector<16x128xf32>,
    } else {
    }
    %c0_i32_1 = arith.constant 0 : i32
    %3 = arith.cmpi sgt, %arg1, %c0_i32_1 : i32
    %4 = arith.extui %3 : i1 to i32
    %c0_i32_2 = arith.constant 0 : i32
    %5 = arith.cmpi ne, %4, %c0_i32_2 : i32
    scf.if %5 {
      %c0 = arith.constant 0 : index
      %c0_4 = arith.constant 0 : index
      %9 = vector.load %arg10[%c0, %c0_4] : memref<16x128xf32, #tpu.memory_space<vmem>>, vector<16x128xf32>
      %cst = arith.constant 0.000000e+00 : f32
      %10 = vector.broadcast %cst : f32 to vector<16x128xf32>
      %11 = arith.maximumf %9, %10 : vector<16x128xf32>
      %12 = arith.truncf %11 : vector<16x128xf32> to vector<16x128xbf16>
      %c0_5 = arith.constant 0 : index
      %c0_6 = arith.constant 0 : index
      %c0_7 = arith.constant 0 : index
      %13 = vector.load %arg5[%c0_5, %c0_6, %c0_7] : memref<1x128x128xbf16, #tpu.memory_space<vmem>>, vector<1x128x128xbf16>
      %14 = vector.shape_cast %13 : vector<1x128x128xbf16> to vector<128x128xbf16>
      %cst_8 = arith.constant dense<0.000000e+00> : vector<16x128xf32>
      %15 = tpu.matmul %12, %14, %cst_8 {dimension_numbers = #tpu.dot_dimension_numbers<[1], [0], [0], [1], [0, 0, 1, 1], [], []>} : vector<16x128xbf16>, vector<128x128xbf16>, vector<16x128xf32> -> vector<16x128xf32>
      %c0_9 = arith.constant 0 : index
      %c0_10 = arith.constant 0 : index
      %c0_11 = arith.constant 0 : index
      %16 = vector.load %arg6[%c0_9, %c0_10, %c0_11] : memref<1x1x128xf32, #tpu.memory_space<vmem>>, vector<1x1x128xf32>
      %17 = vector.shape_cast %16 : vector<1x1x128xf32> to vector<1x128xf32>
      %18 = vector.broadcast %17 : vector<1x128xf32> to vector<16x128xf32>
      %19 = arith.addf %15, %18 : vector<16x128xf32>
      %c0_12 = arith.constant 0 : index
      %c0_13 = arith.constant 0 : index
      %20 = vector.load %arg10[%c0_12, %c0_13] : memref<16x128xf32, #tpu.memory_space<vmem>>, vector<16x128xf32>
      tpu.vector_store %arg10[%c0_12, %c0_13], %19 {strides = array<i32>} : memref<16x128xf32, #tpu.memory_space<vmem>>, vector<16x128xf32>,
    } else {
    }
    %c2_i32 = arith.constant 2 : i32
    %6 = arith.cmpi eq, %arg1, %c2_i32 : i32
    %7 = arith.extui %6 : i1 to i32
    %c0_i32_3 = arith.constant 0 : i32
    %8 = arith.cmpi ne, %7, %c0_i32_3 : i32
    scf.if %8 {
      %c0 = arith.constant 0 : index
      %c0_4 = arith.constant 0 : index
      %9 = vector.load %arg10[%c0, %c0_4] : memref<16x128xf32, #tpu.memory_space<vmem>>, vector<16x128xf32>
      %10 = arith.truncf %9 : vector<16x128xf32> to vector<16x128xbf16>
      %c0_5 = arith.constant 0 : index
      %c0_6 = arith.constant 0 : index
      %11 = vector.load %arg7[%c0_5, %c0_6] : memref<128x128xbf16, #tpu.memory_space<vmem>>, vector<128x128xbf16>
      %cst = arith.constant dense<0.000000e+00> : vector<16x128xf32>
      %12 = tpu.matmul %10, %11, %cst {dimension_numbers = #tpu.dot_dimension_numbers<[1], [0], [0], [1], [0, 0, 1, 1], [], []>} : vector<16x128xbf16>, vector<128x128xbf16>, vector<16x128xf32> -> vector<16x128xf32>
      %c0_7 = arith.constant 0 : index
      %c0_8 = arith.constant 0 : index
      %13 = vector.load %arg8[%c0_7, %c0_8] : memref<1x128xf32, #tpu.memory_space<vmem>>, vector<1x128xf32>
      %14 = vector.broadcast %13 : vector<1x128xf32> to vector<16x128xf32>
      %15 = arith.addf %12, %14 : vector<16x128xf32>
      %c0_9 = arith.constant 0 : index
      %c0_10 = arith.constant 0 : index
      %16 = vector.load %arg9[%c0_9, %c0_10] : memref<16x128xf32, #tpu.memory_space<vmem>>, vector<16x128xf32>
      tpu.vector_store %arg9[%c0_9, %c0_10], %15 {strides = array<i32>} : memref<16x128xf32, #tpu.memory_space<vmem>>, vector<16x128xf32>,
    } else {
    }
    return
  }
  func.func @transform_0(%arg0: i32, %arg1: i32) -> (i32, i32) {
    %c0_i32 = arith.constant 0 : i32
    %c0_i32_0 = arith.constant 0 : i32
    return %arg0, %c0_i32 : i32, i32
  }
  func.func @transform_1(%arg0: i32, %arg1: i32) -> (i32, i32) {
    %c0_i32 = arith.constant 0 : i32
    %c0_i32_0 = arith.constant 0 : i32
    %c0_i32_1 = arith.constant 0 : i32
    return %c0_i32, %c0_i32_0 : i32, i32
  }
  func.func @transform_2(%arg0: i32, %arg1: i32) -> (i32, i32) {
    %c0_i32 = arith.constant 0 : i32
    %c0_i32_0 = arith.constant 0 : i32
    %c0_i32_1 = arith.constant 0 : i32
    return %c0_i32, %c0_i32_0 : i32, i32
  }
  func.func @transform_3(%arg0: i32, %arg1: i32) -> (i32, i32, i32) {
    %c1_i32 = arith.constant 1 : i32
    %0 = arith.subi %arg1, %c1_i32 : i32
    %c0_i32 = arith.constant 0 : i32
    %1 = arith.maxsi %0, %c0_i32 : i32
    %c0_i32_0 = arith.constant 0 : i32
    %c0_i32_1 = arith.constant 0 : i32
    %c0_i32_2 = arith.constant 0 : i32
    return %1, %c0_i32_0, %c0_i32_1 : i32, i32, i32
  }
  func.func @transform_4(%arg0: i32, %arg1: i32) -> (i32, i32, i32) {
    %c1_i32 = arith.constant 1 : i32
    %0 = arith.subi %arg1, %c1_i32 : i32
    %c0_i32 = arith.constant 0 : i32
    %1 = arith.maxsi %0, %c0_i32 : i32
    %c0_i32_0 = arith.constant 0 : i32
    %c0_i32_1 = arith.constant 0 : i32
    %c0_i32_2 = arith.constant 0 : i32
    return %1, %c0_i32_0, %c0_i32_1 : i32, i32, i32
  }
  func.func @transform_5(%arg0: i32, %arg1: i32) -> (i32, i32) {
    %c0_i32 = arith.constant 0 : i32
    %c0_i32_0 = arith.constant 0 : i32
    %c0_i32_1 = arith.constant 0 : i32
    return %c0_i32, %c0_i32_0 : i32, i32
  }
  func.func @transform_6(%arg0: i32, %arg1: i32) -> (i32, i32) {
    %c0_i32 = arith.constant 0 : i32
    %c0_i32_0 = arith.constant 0 : i32
    %c0_i32_1 = arith.constant 0 : i32
    return %c0_i32, %c0_i32_0 : i32, i32
  }
  func.func @transform_7(%arg0: i32, %arg1: i32) -> (i32, i32) {
    %c0_i32 = arith.constant 0 : i32
    %c0_i32_0 = arith.constant 0 : i32
    return %arg0, %c0_i32 : i32, i32
  }
}

module attributes {stable_mosaic.version = 11 : i64} {
  func.func @mlp_kernel(%arg0: i32, %arg1: i32, %arg2: memref<16x128xbf16, #tpu.memory_space<vmem>>, %arg3: memref<128x128xbf16, #tpu.memory_space<vmem>>, %arg4: memref<1x128xf32, #tpu.memory_space<vmem>>, %arg5: memref<1x128x128xbf16, #tpu.memory_space<vmem>>, %arg6: memref<1x1x128xf32, #tpu.memory_space<vmem>>, %arg7: memref<128x128xbf16, #tpu.memory_space<vmem>>, %arg8: memref<1x128xf32, #tpu.memory_space<vmem>>, %arg9: memref<16x128xf32, #tpu.memory_space<vmem>>, %arg10: memref<16x128xf32, #tpu.memory_space<vmem>>) attributes {dimension_semantics = [#tpu.dimension_semantics<parallel>, #tpu.dimension_semantics<arbitrary>], iteration_bounds = array<i64: 1, 3>, scalar_prefetch = 0 : i64, scratch_operands = 1 : i64, tpu.core_type = #tpu.core_type<tc>, window_params = [{transform_indices = @transform_0, window_bounds = array<i64: 16, 128>}, {pipeline_mode = #tpu.pipeline_mode<synchronous>, transform_indices = @transform_1, window_bounds = array<i64: 128, 128>}, {pipeline_mode = #tpu.pipeline_mode<synchronous>, transform_indices = @transform_2, window_bounds = array<i64: 1, 128>}, {transform_indices = @transform_3, window_bounds = array<i64: 1, 128, 128>}, {transform_indices = @transform_4, window_bounds = array<i64: 1, 1, 128>}, {pipeline_mode = #tpu.pipeline_mode<synchronous>, transform_indices = @transform_5, window_bounds = array<i64: 128, 128>}, {pipeline_mode = #tpu.pipeline_mode<synchronous>, transform_indices = @transform_6, window_bounds = array<i64: 1, 128>}, {transform_indices = @transform_7, window_bounds = array<i64: 16, 128>}]} {
    %c0_i32 = arith.constant 0 : i32
    %0 = arith.cmpi eq, %arg1, %c0_i32 : i32
    %1 = arith.extui %0 : i1 to i32
    %c0_i32_0 = arith.constant 0 : i32
    %2 = arith.cmpi ne, %1, %c0_i32_0 : i32
    scf.if %2 {
      %c0 = arith.constant 0 : index
      %c0_4 = arith.constant 0 : index
      %9 = vector.load %arg2[%c0, %c0_4] : memref<16x128xbf16, #tpu.memory_space<vmem>>, vector<16x128xbf16>
      %c0_5 = arith.constant 0 : index
      %c0_6 = arith.constant 0 : index
      %10 = vector.load %arg3[%c0_5, %c0_6] : memref<128x128xbf16, #tpu.memory_space<vmem>>, vector<128x128xbf16>
      %cst = arith.constant dense<0.000000e+00> : vector<16x128xf32>
      %11 = tpu.matmul %9, %10, %cst {dimension_numbers = #tpu.dot_dimension_numbers<[1], [0], [0], [1], [0, 0, 1, 1], [], []>} : vector<16x128xbf16>, vector<128x128xbf16>, vector<16x128xf32> -> vector<16x128xf32>
      %c0_7 = arith.constant 0 : index
      %c0_8 = arith.constant 0 : index
      %12 = vector.load %arg4[%c0_7, %c0_8] : memref<1x128xf32, #tpu.memory_space<vmem>>, vector<1x128xf32>
      %13 = vector.broadcast %12 : vector<1x128xf32> to vector<16x128xf32>
      %14 = arith.addf %11, %13 : vector<16x128xf32>
      %c0_9 = arith.constant 0 : index
      %c0_10 = arith.constant 0 : index
      %15 = vector.load %arg10[%c0_9, %c0_10] : memref<16x128xf32, #tpu.memory_space<vmem>>, vector<16x128xf32>
      tpu.vector_store %arg10[%c0_9, %c0_10], %14 {strides = array<i32>} : memref<16x128xf32, #tpu.memory_space<vmem>>, vector<16x128xf32>,
    } else {
    }
    %c0_i32_1 = arith.constant 0 : i32
    %3 = arith.cmpi sgt, %arg1, %c0_i32_1 : i32
    %4 = arith.extui %3 : i1 to i32
    %c0_i32_2 = arith.constant 0 : i32
    %5 = arith.cmpi ne, %4, %c0_i32_2 : i32
    scf.if %5 {
      %c0 = arith.constant 0 : index
      %c0_4 = arith.constant 0 : index
      %9 = vector.load %arg10[%c0, %c0_4] : memref<16x128xf32, #tpu.memory_space<vmem>>, vector<16x128xf32>
      %cst = arith.constant 0.000000e+00 : f32
      %10 = vector.broadcast %cst : f32 to vector<16x128xf32>
      %11 = arith.maximumf %9, %10 : vector<16x128xf32>
      %12 = arith.truncf %11 : vector<16x128xf32> to vector<16x128xbf16>
      %c0_5 = arith.constant 0 : index
      %c0_6 = arith.constant 0 : index
      %c0_7 = arith.constant 0 : index
      %13 = vector.load %arg5[%c0_5, %c0_6, %c0_7] : memref<1x128x128xbf16, #tpu.memory_space<vmem>>, vector<1x128x128xbf16>
      %14 = vector.shape_cast %13 : vector<1x128x128xbf16> to vector<128x128xbf16>
      %cst_8 = arith.constant dense<0.000000e+00> : vector<16x128xf32>
      %15 = tpu.matmul %12, %14, %cst_8 {dimension_numbers = #tpu.dot_dimension_numbers<[1], [0], [0], [1], [0, 0, 1, 1], [], []>} : vector<16x128xbf16>, vector<128x128xbf16>, vector<16x128xf32> -> vector<16x128xf32>
      %c0_9 = arith.constant 0 : index
      %c0_10 = arith.constant 0 : index
      %c0_11 = arith.constant 0 : index
      %16 = vector.load %arg6[%c0_9, %c0_10, %c0_11] : memref<1x1x128xf32, #tpu.memory_space<vmem>>, vector<1x1x128xf32>
      %17 = vector.shape_cast %16 : vector<1x1x128xf32> to vector<1x128xf32>
      %18 = vector.broadcast %17 : vector<1x128xf32> to vector<16x128xf32>
      %19 = arith.addf %15, %18 : vector<16x128xf32>
      %c0_12 = arith.constant 0 : index
      %c0_13 = arith.constant 0 : index
      %20 = vector.load %arg10[%c0_12, %c0_13] : memref<16x128xf32, #tpu.memory_space<vmem>>, vector<16x128xf32>
      tpu.vector_store %arg10[%c0_12, %c0_13], %19 {strides = array<i32>} : memref<16x128xf32, #tpu.memory_space<vmem>>, vector<16x128xf32>,
    } else {
    }
    %c2_i32 = arith.constant 2 : i32
    %6 = arith.cmpi eq, %arg1, %c2_i32 : i32
    %7 = arith.extui %6 : i1 to i32
    %c0_i32_3 = arith.constant 0 : i32
    %8 = arith.cmpi ne, %7, %c0_i32_3 : i32
    scf.if %8 {
      %c0 = arith.constant 0 : index
      %c0_4 = arith.constant 0 : index
      %9 = vector.load %arg10[%c0, %c0_4] : memref<16x128xf32, #tpu.memory_space<vmem>>, vector<16x128xf32>
      %10 = arith.truncf %9 : vector<16x128xf32> to vector<16x128xbf16>
      %c0_5 = arith.constant 0 : index
      %c0_6 = arith.constant 0 : index
      %11 = vector.load %arg7[%c0_5, %c0_6] : memref<128x128xbf16, #tpu.memory_space<vmem>>, vector<128x128xbf16>
      %cst = arith.constant dense<0.000000e+00> : vector<16x128xf32>
      %12 = tpu.matmul %10, %11, %cst {dimension_numbers = #tpu.dot_dimension_numbers<[1], [0], [0], [1], [0, 0, 1, 1], [], []>} : vector<16x128xbf16>, vector<128x128xbf16>, vector<16x128xf32> -> vector<16x128xf32>
      %c0_7 = arith.constant 0 : index
      %c0_8 = arith.constant 0 : index
      %13 = vector.load %arg8[%c0_7, %c0_8] : memref<1x128xf32, #tpu.memory_space<vmem>>, vector<1x128xf32>
      %14 = vector.broadcast %13 : vector<1x128xf32> to vector<16x128xf32>
      %15 = arith.addf %12, %14 : vector<16x128xf32>
      %c0_9 = arith.constant 0 : index
      %c0_10 = arith.constant 0 : index
      %16 = vector.load %arg9[%c0_9, %c0_10] : memref<16x128xf32, #tpu.memory_space<vmem>>, vector<16x128xf32>
      tpu.vector_store %arg9[%c0_9, %c0_10], %15 {strides = array<i32>} : memref<16x128xf32, #tpu.memory_space<vmem>>, vector<16x128xf32>,
    } else {
    }
    return
  }
  func.func @transform_0(%arg0: i32, %arg1: i32) -> (i32, i32) {
    %c0_i32 = arith.constant 0 : i32
    %c0_i32_0 = arith.constant 0 : i32
    return %arg0, %c0_i32 : i32, i32
  }
  func.func @transform_1(%arg0: i32, %arg1: i32) -> (i32, i32) {
    %c0_i32 = arith.constant 0 : i32
    %c0_i32_0 = arith.constant 0 : i32
    %c0_i32_1 = arith.constant 0 : i32
    return %c0_i32, %c0_i32_0 : i32, i32
  }
  func.func @transform_2(%arg0: i32, %arg1: i32) -> (i32, i32) {
    %c0_i32 = arith.constant 0 : i32
    %c0_i32_0 = arith.constant 0 : i32
    %c0_i32_1 = arith.constant 0 : i32
    return %c0_i32, %c0_i32_0 : i32, i32
  }
  func.func @transform_3(%arg0: i32, %arg1: i32) -> (i32, i32, i32) {
    %c1_i32 = arith.constant 1 : i32
    %0 = arith.subi %arg1, %c1_i32 : i32
    %c0_i32 = arith.constant 0 : i32
    %1 = arith.maxsi %0, %c0_i32 : i32
    %c0_i32_0 = arith.constant 0 : i32
    %c0_i32_1 = arith.constant 0 : i32
    %c0_i32_2 = arith.constant 0 : i32
    return %1, %c0_i32_0, %c0_i32_1 : i32, i32, i32
  }
  func.func @transform_4(%arg0: i32, %arg1: i32) -> (i32, i32, i32) {
    %c1_i32 = arith.constant 1 : i32
    %0 = arith.subi %arg1, %c1_i32 : i32
    %c0_i32 = arith.constant 0 : i32
    %1 = arith.maxsi %0, %c0_i32 : i32
    %c0_i32_0 = arith.constant 0 : i32
    %c0_i32_1 = arith.constant 0 : i32
    %c0_i32_2 = arith.constant 0 : i32
    return %1, %c0_i32_0, %c0_i32_1 : i32, i32, i32
  }
  func.func @transform_5(%arg0: i32, %arg1: i32) -> (i32, i32) {
    %c0_i32 = arith.constant 0 : i32
    %c0_i32_0 = arith.constant 0 : i32
    %c0_i32_1 = arith.constant 0 : i32
    return %c0_i32, %c0_i32_0 : i32, i32
  }
  func.func @transform_6(%arg0: i32, %arg1: i32) -> (i32, i32) {
    %c0_i32 = arith.constant 0 : i32
    %c0_i32_0 = arith.constant 0 : i32
    %c0_i32_1 = arith.constant 0 : i32
    return %c0_i32, %c0_i32_0 : i32, i32
  }
  func.func @transform_7(%arg0: i32, %arg1: i32) -> (i32, i32) {
    %c0_i32 = arith.constant 0 : i32
    %c0_i32_0 = arith.constant 0 : i32
    return %arg0, %c0_i32 : i32, i32
  }
}

</mosaic_0001>

<llo_original>
// kernel: tpu_custom_call.1
$region0: #{tpu_custom_call.1}
  #allocation0 [shape = 'u32[]', space=smem, size = 0x4, offset = 0x4, fixed_abs, tag = 'smem constant byte address 0x4 - core index']
  #allocation1 [shape = 'u32[144,128]{1,0:T(1,128)}', space=vmem, size = 0x12000, scoped, tag = 'internal scratch']
  #allocation2 [shape = 'f32[16,128]{1,0:T(8,128)}', space=vmem, size = 0x2000, scoped, tag = 'scratch operand']
  %s0 = inlined_call_operand.hbm [shape: bf16[16,128], index: 0, kind: input, shape index: {}]
  %s1 = inlined_call_operand.hbm [shape: bf16[128,128], index: 1, kind: input, shape index: {}]
  %s2 = inlined_call_operand.vmem [shape: f32[1,128], index: 2, kind: input, shape index: {}]
  %s3 = inlined_call_operand.hbm [shape: bf16[2,128,128], index: 3, kind: input, shape index: {}]
  %s4 = inlined_call_operand.vmem [shape: f32[2,1,128], index: 4, kind: input, shape index: {}]
  %s5 = inlined_call_operand.hbm [shape: bf16[128,128], index: 5, kind: input, shape index: {}]
  %s6 = inlined_call_operand.vmem [shape: f32[1,128], index: 6, kind: input, shape index: {}]
  %s7 = inlined_call_operand.hbm [shape: f32[16,128], index: 7, kind: output, shape index: {}]
  %s8 = sld [smem:[#allocation0]]
  $region89: #{tpu_custom_call.1} parent=0
    _
  %s10 = ssub.s32 1, %s8
  %s11 = scalar_select 0, %s10, %s8
  $region1: #{tpu_custom_call.1} parent=0
    #allocation3 [shape = 'u8[4096]{0}', space=vmem, size = 0x1000, scoped, tag = 'input window, operand 0, single buffered']
    #allocation4 [shape = 's32[2]{0}', space=sflag, size = 0x8, scoped, tag = 'scoped memory for tpu_custom_call.1']
    #allocation5 [shape = 's32[2]{0}', space=sflag, size = 0x8, scoped, tag = 'scoped memory for tpu_custom_call.1']
    #allocation6 [shape = 'u8[32768]{0}', space=vmem, size = 0x8000, scoped, tag = 'input window, operand 1, single buffered']
    #allocation7 [shape = 's32[1]{0}', space=sflag, size = 0x4, scoped, tag = 'scoped memory for tpu_custom_call.1']
    #allocation8 [shape = 'u8[65536]{0}', space=vmem, size = 0x10000, scoped, tag = 'input window, operand 3']
    #allocation9 [shape = 'u8[32768]{0}', space=vmem, size = 0x8000, scoped, tag = 'input window, operand 5, single buffered']
    #allocation10 [shape = 'u8[8192]{0}', space=vmem, size = 0x2000, scoped, tag = 'output window, operand 0, single buffered']
    %12 = vsyncpa [#allocation4], 0
    %13 = vsyncpa [#allocation7], 0
    %14 = vsyncpa [#allocation5], 0
    loop: start=0, step=1, limit=5
    $region2: #{tpu_custom_call.1} parent=1 // loop_pre_header
      _
    $region3: #{tpu_custom_call.1} parent=1 // loop_header
      %s16 = sphi 0, %s20
      %p17 = scmp.ge.s32.totalorder %s16, 5
      %s23 = sphi 0, %s35
      %s24 = sphi 0, %s31
      %s25 = sphi 0, %s23
      %s26 = sphi 0, %s24
      %s27 = sphi 0, %s25
      %s28 = sphi 0, %s26
      %s38 = sphi 0, %s40
      %s41 = sphi 0, %s38
      %s42 = sphi 0, %s41
      %s58 = sphi 0, %s42
      %s62 = sphi 0, %s62
      %s64 = sphi 0, %s62
      %s65 = sphi 0, %s64
      %s79 = sphi 0, %s65
      %s83 = sphi 0, %s83
      %s85 = sphi 0, %s83
      %s86 = sphi 0, %s85
      %s100 = sphi 0, %s86
      %s112 = sphi 0, %s114
      %s115 = sphi 0, %s112
      %s116 = sphi 0, %s115
      %s132 = sphi 0, %s116
      %s144 = sphi 0, %s146
      %s147 = sphi 0, %s144
      %s148 = sphi 0, %s147
      %s164 = sphi 0, %s148
      %s168 = sphi 0, %s168
      %s170 = sphi 0, %s168
      %s171 = sphi 0, %s170
      %s185 = sphi 0, %s171
      %s189 = sphi 0, %s189
      %s191 = sphi 0, %s189
      %s192 = sphi 0, %s191
      %s206 = sphi 0, %s192
      %s212 = sphi 0, %s214
      %s215 = sphi 0, %s212
      %s216 = sphi 0, %s215
      %s232 = sphi 0, %s216
    $region4: #{tpu_custom_call.1} parent=1 // loop_header_branch
      %19 = sbr.rel (%p17) target = $region8
    $region5: #{tpu_custom_call.1} parent=1 // loop_body
      %s21 = ssub.s32 %s16, 1
      %s22 = ssub.s32 %s16, 2
      %s29 = sadd.s32 1, %s24
      %p30 = scmp.ge.s32.totalorder %s29, 3
      %s31 = scalar_select %p30, 0, %s29
      %s32 = sadd.s32 1, %s23
      %s33 = scalar_select %p30, %s32, %s23
      %p34 = scmp.ge.s32.totalorder %s33, 1
      %s35 = scalar_select %p34, 0, %s33
      %s36 = ssub.s32 %s23, %s35
      %p37 = scmp.eq.s32.totalorder %s36, 0
      %s39 = sadd.s32 %s38, 1
      %s40 = scalar_select %p37, %s38, %s39
      %p43 = pneg %p37
      %p44 = scmp.eq.s32.totalorder %s16, 2
      %p45 = por %p43, %p44
      %p46 = scmp.ne.s32.totalorder %s38, %s41
      %p47 = scmp.eq.s32.totalorder %s16, 0
      %p48 = por %p46, %p47
      %p49 = scmp.ne.s32.totalorder %s38, %s41
      %p50 = scmp.eq.s32.totalorder %s21, 2
      %p51 = por %p49, %p50
      %p52 = scmp.ne.s32.totalorder %s41, %s42
      %p53 = scmp.eq.s32.totalorder %s21, 0
      %p54 = por %p52, %p53
      %p55 = scmp.ne.s32.totalorder %s41, %s42
      %p56 = scmp.eq.s32.totalorder %s22, 2
      %p57 = por %p55, %p56
      %p59 = scmp.ne.s32.totalorder %s42, %s58
      %p60 = scmp.eq.s32.totalorder %s22, 0
      %p61 = por %p59, %p60
      %s63 = sadd.s32 %s62, 1
      %p66 = scmp.eq.s32.totalorder %s16, 2
      %p67 = scmp.ne.s32.totalorder %s62, %s64
      %p68 = scmp.eq.s32.totalorder %s16, 0
      %p69 = por %p67, %p68
      %p70 = scmp.ne.s32.totalorder %s62, %s64
      %p71 = scmp.eq.s32.totalorder %s21, 2
      %p72 = por %p70, %p71
      %p73 = scmp.ne.s32.totalorder %s64, %s65
      %p74 = scmp.eq.s32.totalorder %s21, 0
      %p75 = por %p73, %p74
      %p76 = scmp.ne.s32.totalorder %s64, %s65
      %p77 = scmp.eq.s32.totalorder %s22, 2
      %p78 = por %p76, %p77
      %p80 = scmp.ne.s32.totalorder %s65, %s79
      %p81 = scmp.eq.s32.totalorder %s22, 0
      %p82 = por %p80, %p81
      %s84 = sadd.s32 %s83, 1
      %p87 = scmp.eq.s32.totalorder %s16, 2
      %p88 = scmp.ne.s32.totalorder %s83, %s85
      %p89 = scmp.eq.s32.totalorder %s16, 0
      %p90 = por %p88, %p89
      %p91 = scmp.ne.s32.totalorder %s83, %s85
      %p92 = scmp.eq.s32.totalorder %s21, 2
      %p93 = por %p91, %p92
      %p94 = scmp.ne.s32.totalorder %s85, %s86
      %p95 = scmp.eq.s32.totalorder %s21, 0
      %p96 = por %p94, %p95
      %p97 = scmp.ne.s32.totalorder %s85, %s86
      %p98 = scmp.eq.s32.totalorder %s22, 2
      %p99 = por %p97, %p98
      %p101 = scmp.ne.s32.totalorder %s86, %s100
      %p102 = scmp.eq.s32.totalorder %s22, 0
      %p103 = por %p101, %p102
      %s104 = ssub.s32 %s24, 1
      %p105 = scmp.gt.s32.totalorder %s104, 0
      %s106 = scalar_select %p105, %s104, 0
      %s107 = ssub.s32 %s31, 1
      %p108 = scmp.gt.s32.totalorder %s107, 0
      %s109 = scalar_select %p108, %s107, 0
      %s110 = ssub.s32 %s106, %s109
      %p111 = scmp.eq.s32.totalorder %s110, 0
      %s113 = sadd.s32 %s112, 1
      %s114 = scalar_select %p111, %s112, %s113
      %p117 = pneg %p111
      %p118 = scmp.eq.s32.totalorder %s16, 2
      %p119 = por %p117, %p118
      %p120 = scmp.ne.s32.totalorder %s112, %s115
      %p121 = scmp.eq.s32.totalorder %s16, 0
      %p122 = por %p120, %p121
      %p123 = scmp.ne.s32.totalorder %s112, %s115
      %p124 = scmp.eq.s32.totalorder %s21, 2
      %p125 = por %p123, %p124
      %p126 = scmp.ne.s32.totalorder %s115, %s116
      %p127 = scmp.eq.s32.totalorder %s21, 0
      %p128 = por %p126, %p127
      %p129 = scmp.ne.s32.totalorder %s115, %s116
      %p130 = scmp.eq.s32.totalorder %s22, 2
      %p131 = por %p129, %p130
      %p133 = scmp.ne.s32.totalorder %s116, %s132
      %p134 = scmp.eq.s32.totalorder %s22, 0
      %p135 = por %p133, %p134
      %s136 = ssub.s32 %s24, 1
      %p137 = scmp.gt.s32.totalorder %s136, 0
      %s138 = scalar_select %p137, %s136, 0
      %s139 = ssub.s32 %s31, 1
      %p140 = scmp.gt.s32.totalorder %s139, 0
      %s141 = scalar_select %p140, %s139, 0
      %s142 = ssub.s32 %s138, %s141
      %p143 = scmp.eq.s32.totalorder %s142, 0
      %s145 = sadd.s32 %s144, 1
      %s146 = scalar_select %p143, %s144, %s145
      %p149 = pneg %p143
      %p150 = scmp.eq.s32.totalorder %s16, 2
      %p151 = por %p149, %p150
      %p152 = scmp.ne.s32.totalorder %s144, %s147
      %p153 = scmp.eq.s32.totalorder %s16, 0
      %p154 = por %p152, %p153
      %p155 = scmp.ne.s32.totalorder %s144, %s147
      %p156 = scmp.eq.s32.totalorder %s21, 2
      %p157 = por %p155, %p156
      %p158 = scmp.ne.s32.totalorder %s147, %s148
      %p159 = scmp.eq.s32.totalorder %s21, 0
      %p160 = por %p158, %p159
      %p161 = scmp.ne.s32.totalorder %s147, %s148
      %p162 = scmp.eq.s32.totalorder %s22, 2
      %p163 = por %p161, %p162
      %p165 = scmp.ne.s32.totalorder %s148, %s164
      %p166 = scmp.eq.s32.totalorder %s22, 0
      %p167 = por %p165, %p166
      %s169 = sadd.s32 %s168, 1
      %p172 = scmp.eq.s32.totalorder %s16, 2
      %p173 = scmp.ne.s32.totalorder %s168, %s170
      %p174 = scmp.eq.s32.totalorder %s16, 0
      %p175 = por %p173, %p174
      %p176 = scmp.ne.s32.totalorder %s168, %s170
      %p177 = scmp.eq.s32.totalorder %s21, 2
      %p178 = por %p176, %p177
      %p179 = scmp.ne.s32.totalorder %s170, %s171
      %p180 = scmp.eq.s32.totalorder %s21, 0
      %p181 = por %p179, %p180
      %p182 = scmp.ne.s32.totalorder %s170, %s171
      %p183 = scmp.eq.s32.totalorder %s22, 2
      %p184 = por %p182, %p183
      %p186 = scmp.ne.s32.totalorder %s171, %s185
      %p187 = scmp.eq.s32.totalorder %s22, 0
      %p188 = por %p186, %p187
      %s190 = sadd.s32 %s189, 1
      %p193 = scmp.eq.s32.totalorder %s16, 2
      %p194 = scmp.ne.s32.totalorder %s189, %s191
      %p195 = scmp.eq.s32.totalorder %s16, 0
      %p196 = por %p194, %p195
      %p197 = scmp.ne.s32.totalorder %s189, %s191
      %p198 = scmp.eq.s32.totalorder %s21, 2
      %p199 = por %p197, %p198
      %p200 = scmp.ne.s32.totalorder %s191, %s192
      %p201 = scmp.eq.s32.totalorder %s21, 0
      %p202 = por %p200, %p201
      %p203 = scmp.ne.s32.totalorder %s191, %s192
      %p204 = scmp.eq.s32.totalorder %s22, 2
      %p205 = por %p203, %p204
      %p207 = scmp.ne.s32.totalorder %s192, %s206
      %p208 = scmp.eq.s32.totalorder %s22, 0
      %p209 = por %p207, %p208
      %s210 = ssub.s32 %s23, %s35
      %p211 = scmp.eq.s32.totalorder %s210, 0
      %s213 = sadd.s32 %s212, 1
      %s214 = scalar_select %p211, %s212, %s213
      %p217 = pneg %p211
      %p218 = scmp.eq.s32.totalorder %s16, 2
      %p219 = por %p217, %p218
      %p220 = scmp.ne.s32.totalorder %s212, %s215
      %p221 = scmp.eq.s32.totalorder %s16, 0
      %p222 = por %p220, %p221
      %p223 = scmp.ne.s32.totalorder %s212, %s215
      %p224 = scmp.eq.s32.totalorder %s21, 2
      %p225 = por %p223, %p224
      %p226 = scmp.ne.s32.totalorder %s215, %s216
      %p227 = scmp.eq.s32.totalorder %s21, 0
      %p228 = por %p226, %p227
      %p229 = scmp.ne.s32.totalorder %s215, %s216
      %p230 = scmp.eq.s32.totalorder %s22, 2
      %p231 = por %p229, %p230
      %p233 = scmp.ne.s32.totalorder %s216, %s232
      %p234 = scmp.eq.s32.totalorder %s22, 0
      %p235 = por %p233, %p234
      %p236 = scmp.le.s32.totalorder 1, %s16
      %p237 = scmp.lt.s32.totalorder %s16, 4
      %p238 = pnand %p236, %p237
      %p239 = pneg %p238
      // Predicated region
      $region9: #{tpu_custom_call.1} parent=5 // pred_check
        _
      $region10: #{tpu_custom_call.1} parent=5 // pred_check_branch
        %241 = sbr.rel (%p238) target = $region12
      $region11: #{tpu_custom_call.1} parent=5 // pred_region
        %s242 = ssub.s32 %s16, 1
        // Predicated region
        $region13: #{tpu_custom_call.1} parent=11 // pred_check
          %p243 = pneg %p54
        $region14: #{tpu_custom_call.1} parent=11 // pred_check_branch
          %245 = sbr.rel (%p243) target = $region16
        $region15: #{tpu_custom_call.1} parent=11 // pred_region
          %s246 = smul.u32 2, %s25
          %s248 = ssub.s32 128, 128
          %249 = vsyncadd [#allocation4], %s248
          %s250 = smul.addr %s246, 64
          %s251 = scalar_lea.hbm %s0, %s250
          %s252 = sshll.u32 [#allocation3], 4
          %s253 = int_to_ptr.vmem [resolvable:$true] %s252
          %258 = dma.hbm_to_vmem [thread:$0]  %s251, 128, %s253, [#allocation4], 64, 64, 4
        $region16: #{tpu_custom_call.1} parent=11 // pred_fallthru
          _
        // Predicated region
        $region17: #{tpu_custom_call.1} parent=11 // pred_check
          %p259 = pneg %p75
        $region18: #{tpu_custom_call.1} parent=11 // pred_check_branch
          %261 = sbr.rel (%p259) target = $region20
        $region19: #{tpu_custom_call.1} parent=11 // pred_region
          %s263 = ssub.s32 1024, 1024
          %264 = vsyncadd [#allocation7], %s263
          %s265 = sshll.u32 [#allocation6], 4
          %s266 = int_to_ptr.vmem [resolvable:$true] %s265
          %271 = dma.hbm_to_vmem [thread:$0]  %s1, 1024, %s266, [#allocation7], 64, 64, 4
        $region20: #{tpu_custom_call.1} parent=11 // pred_fallthru
          _
        // Predicated region
        $region21: #{tpu_custom_call.1} parent=11 // pred_check
          %p272 = pneg %p96
        $region22: #{tpu_custom_call.1} parent=11 // pred_check_branch
          %274 = sbr.rel (%p272) target = $region24
        $region23: #{tpu_custom_call.1} parent=11 // pred_region
          _
        $region24: #{tpu_custom_call.1} parent=11 // pred_fallthru
          _
        // Predicated region
        $region25: #{tpu_custom_call.1} parent=11 // pred_check
          %p275 = pneg %p181
        $region26: #{tpu_custom_call.1} parent=11 // pred_check_branch
          %277 = sbr.rel (%p275) target = $region28
        $region27: #{tpu_custom_call.1} parent=11 // pred_region
          %s279 = ssub.s32 1024, 1024
          %280 = vsyncadd [#allocation7], %s279
          %s281 = sshll.u32 [#allocation9], 4
          %s282 = int_to_ptr.vmem [resolvable:$true] %s281
          %287 = dma.hbm_to_vmem [thread:$0]  %s5, 1024, %s282, [#allocation7], 64, 64, 4
        $region28: #{tpu_custom_call.1} parent=11 // pred_fallthru
          _
        // Predicated region
        $region29: #{tpu_custom_call.1} parent=11 // pred_check
          %p288 = pneg %p202
        $region30: #{tpu_custom_call.1} parent=11 // pred_check_branch
          %290 = sbr.rel (%p288) target = $region32
        $region31: #{tpu_custom_call.1} parent=11 // pred_region
          _
        $region32: #{tpu_custom_call.1} parent=11 // pred_fallthru
          _
      $region12: #{tpu_custom_call.1} parent=5 // pred_fallthru
        _
      %p291 = scmp.lt.s32.totalorder %s16, 3
      // Predicated region
      $region33: #{tpu_custom_call.1} parent=5 // pred_check
        %p292 = pneg %p291
      $region34: #{tpu_custom_call.1} parent=5 // pred_check_branch
        %294 = sbr.rel (%p292) target = $region36
      $region35: #{tpu_custom_call.1} parent=5 // pred_region
        // Predicated region
        $region37: #{tpu_custom_call.1} parent=35 // pred_check
          %p295 = pneg %p122
        $region38: #{tpu_custom_call.1} parent=35 // pred_check_branch
          %297 = sbr.rel (%p295) target = $region40
        $region39: #{tpu_custom_call.1} parent=35 // pred_region
          %s298 = sand.u32 %s16, 1
          %s299 = scalar_lea.sflag [#allocation4], %s298
          %s300 = sand.u32 %s112, 1
          %s301 = smul.addr %s300, 64
          %s302 = scalar_lea.vmem [#allocation8], %s301
          %s303 = ssub.s32 %s24, 1
          %p304 = scmp.gt.s32.totalorder %s303, 0
          %s305 = scalar_select %p304, %s303, 0
          %s307 = ssub.s32 1024, 1024
          %308 = vsyncadd %s299, %s307
          %s309 = smul.addr %s305, 16
          %s310 = smul.addr %s309, 64
          %s311 = scalar_lea.hbm %s3, %s310
          %s312 = sshll.u32 %s302, 4
          %s313 = int_to_ptr.vmem [resolvable:$true] %s312
          %318 = dma.hbm_to_vmem [thread:$0]  %s311, 1024, %s313, %s299, 64, 64, 4
        $region40: #{tpu_custom_call.1} parent=35 // pred_fallthru
          _
        // Predicated region
        $region41: #{tpu_custom_call.1} parent=35 // pred_check
          %p319 = pneg %p154
        $region42: #{tpu_custom_call.1} parent=35 // pred_check_branch
          %321 = sbr.rel (%p319) target = $region44
        $region43: #{tpu_custom_call.1} parent=35 // pred_region
          %s322 = ssub.s32 %s24, 1
          %p323 = scmp.gt.s32.totalorder %s322, 0
          %s324 = scalar_select %p323, %s322, 0
          %p325 = scmp.lt.s32.totalorder %s324, 1
          %s326 = scalar_select %p325, %s324, 1
          %s327 = scalar_lea.vmem %s4, %s326
          %s328 = ssub.s32 %s24, 1
          %p329 = scmp.gt.s32.totalorder %s328, 0
          %s330 = scalar_select %p329, %s328, 0
        $region44: #{tpu_custom_call.1} parent=35 // pred_fallthru
          _
      $region36: #{tpu_custom_call.1} parent=5 // pred_fallthru
        _
      %p331 = scmp.le.s32.totalorder 1, %s16
      %p332 = scmp.lt.s32.totalorder %s16, 4
      %p333 = pnand %p331, %p332
      %p334 = pneg %p333
      // Predicated region
      $region45: #{tpu_custom_call.1} parent=5 // pred_check
        _
      $region46: #{tpu_custom_call.1} parent=5 // pred_check_branch
        %336 = sbr.rel (%p333) target = $region48
      $region47: #{tpu_custom_call.1} parent=5 // pred_region
        %s337 = ssub.s32 %s16, 1
        // Predicated region
        $region49: #{tpu_custom_call.1} parent=47 // pred_check
          %p338 = pneg %p54
        $region50: #{tpu_custom_call.1} parent=47 // pred_check_branch
          %340 = sbr.rel (%p338) target = $region52
        $region51: #{tpu_custom_call.1} parent=47 // pred_region
          %341 = dma.done [#allocation4], 128
        $region52: #{tpu_custom_call.1} parent=47 // pred_fallthru
          _
        // Predicated region
        $region53: #{tpu_custom_call.1} parent=47 // pred_check
          %p342 = pneg %p75
        $region54: #{tpu_custom_call.1} parent=47 // pred_check_branch
          %344 = sbr.rel (%p342) target = $region56
        $region55: #{tpu_custom_call.1} parent=47 // pred_region
          %345 = dma.done [#allocation7], 1024
        $region56: #{tpu_custom_call.1} parent=47 // pred_fallthru
          _
        %s346 = sand.u32 %s21, 1
        %s347 = scalar_lea.sflag [#allocation4], %s346
        %s348 = sand.u32 %s115, 1
        %s349 = smul.addr %s348, 64
        %s350 = scalar_lea.vmem [#allocation8], %s349
        // Predicated region
        $region57: #{tpu_custom_call.1} parent=47 // pred_check
          %p351 = pneg %p128
        $region58: #{tpu_custom_call.1} parent=47 // pred_check_branch
          %353 = sbr.rel (%p351) target = $region60
        $region59: #{tpu_custom_call.1} parent=47 // pred_region
          %354 = dma.done %s347, 1024
        $region60: #{tpu_custom_call.1} parent=47 // pred_fallthru
          _
        // Predicated region
        $region61: #{tpu_custom_call.1} parent=47 // pred_check
          %p355 = pneg %p181
        $region62: #{tpu_custom_call.1} parent=47 // pred_check_branch
          %357 = sbr.rel (%p355) target = $region64
        $region63: #{tpu_custom_call.1} parent=47 // pred_region
          %358 = dma.done [#allocation7], 1024
        $region64: #{tpu_custom_call.1} parent=47 // pred_fallthru
          _
        %p359 = pneg %p54
        %p360 = pneg %p51
        %p361 = pneg %p75
        %p362 = pneg %p72
        %p363 = pneg %p96
        %p364 = pneg %p93
        %s365 = sand.u32 %s21, 1
        %s366 = scalar_lea.sflag [#allocation4], %s365
        %s367 = sand.u32 %s115, 1
        %s368 = smul.addr %s367, 64
        %s369 = scalar_lea.vmem [#allocation8], %s368
        %p370 = pneg %p128
        %p371 = pneg %p125
        %s372 = ssub.s32 %s26, 1
        %p373 = scmp.gt.s32.totalorder %s372, 0
        %s374 = scalar_select %p373, %s372, 0
        %p375 = scmp.lt.s32.totalorder %s374, 1
        %s376 = scalar_select %p375, %s374, 1
        %s377 = scalar_lea.vmem %s4, %s376
        %p378 = pneg %p160
        %p379 = pneg %p157
        %p380 = pneg %p181
        %p381 = pneg %p178
        %p382 = pneg %p202
        %p383 = pneg %p199
        %p384 = pneg %p228
        %p385 = pneg %p225
        %s386 = smul.u32 2, %s25
        %s387 = ssub.s32 %s26, 1
        %p388 = scmp.gt.s32.totalorder %s387, 0
        %s389 = scalar_select %p388, %s387, 0
        %s390 = ssub.s32 %s26, 1
        %p391 = scmp.gt.s32.totalorder %s390, 0
        %s392 = scalar_select %p391, %s390, 0
        %p393 = scmp.lt.s32.totalorder %s392, 1
        %s394 = scalar_select %p393, %s392, 1
        %s395 = scalar_lea.vmem %s4, %s394
        %s396 = ssub.s32 %s26, 1
        %p397 = scmp.gt.s32.totalorder %s396, 0
        %s398 = scalar_select %p397, %s396, 0
        %s399 = smul.u32 2, %s25
        %p401 = scmp.eq.s32.totalorder %s26, 0
        // Predicated region
        $region65: #{tpu_custom_call.1} parent=47 // pred_check
          %p402 = pneg %p401
        $region66: #{tpu_custom_call.1} parent=47 // pred_check_branch
          %404 = sbr.rel (%p402) target = $region68
        $region67: #{tpu_custom_call.1} parent=47 // pred_region
          %v405 = vld [vmem:[#allocation3] sm:$0xf]
          %v406 = vld [vmem:[#allocation3 + $0x4] sm:$0xf]
          %v407 = vld [vmem:[#allocation6] sm:$0xf]
          %v408 = vld [vmem:[#allocation6 + $0x4] sm:$0xf]
          %v409 = vld [vmem:[#allocation6 + $0x8] sm:$0xf]
          %v410 = vld [vmem:[#allocation6 + $0xc] sm:$0xf]
          %v411 = vld [vmem:[#allocation6 + $0x10] sm:$0xf]
          %v412 = vld [vmem:[#allocation6 + $0x14] sm:$0xf]
          %v413 = vld [vmem:[#allocation6 + $0x18] sm:$0xf]
          %v414 = vld [vmem:[#allocation6 + $0x1c] sm:$0xf]
          %v415 = vld [vmem:[#allocation6 + $0x20] sm:$0xf]
          %v416 = vld [vmem:[#allocation6 + $0x24] sm:$0xf]
          %v417 = vld [vmem:[#allocation6 + $0x28] sm:$0xf]
          %v418 = vld [vmem:[#allocation6 + $0x2c] sm:$0xf]
          %v419 = vld [vmem:[#allocation6 + $0x30] sm:$0xf]
          %v420 = vld [vmem:[#allocation6 + $0x34] sm:$0xf]
          %v421 = vld [vmem:[#allocation6 + $0x38] sm:$0xf]
          %v422 = vld [vmem:[#allocation6 + $0x3c] sm:$0xf]
          %v423 = vld [vmem:[%s2] sm:$0x1]
          %v425 = vlaneseq
          %v426 = vshrl.u32 %v425, 7
          %v427 = vsub.s32 0, %v426
          %v428 = vrot.slane %v423, %v427
          %v432 = vunpack.c.l.b16 %v405
          %v433 = vunpack.c.l.b16 %v406
          %v434 = vpack.c.b16 %v433, %v432
          %v452 = vunpack.c.l.b16 %v407
          %v453 = vunpack.c.l.b16 %v408
          %v454 = vunpack.c.l.b16 %v409
          %v455 = vunpack.c.l.b16 %v410
          %v456 = vunpack.c.l.b16 %v411
          %v457 = vunpack.c.l.b16 %v412
          %v458 = vunpack.c.l.b16 %v413
          %v459 = vunpack.c.l.b16 %v414
          %v460 = vunpack.c.l.b16 %v415
          %v461 = vunpack.c.l.b16 %v416
          %v462 = vunpack.c.l.b16 %v417
          %v463 = vunpack.c.l.b16 %v418
          %v464 = vunpack.c.l.b16 %v419
          %v465 = vunpack.c.l.b16 %v420
          %v466 = vunpack.c.l.b16 %v421
          %v467 = vunpack.c.l.b16 %v422
          %v468 = vpack.c.b16 %v453, %v452
          %v469 = vpack.c.b16 %v455, %v454
          %v470 = vpack.c.b16 %v457, %v456
          %v471 = vpack.c.b16 %v459, %v458
          %v472 = vpack.c.b16 %v461, %v460
          %v473 = vpack.c.b16 %v463, %v462
          %v474 = vpack.c.b16 %v465, %v464
          %v475 = vpack.c.b16 %v467, %v466
          %484 = vmatprep.subr.bf16.mxu0 0
          %485 = vmatpush1.bf16.msra.mxu0 %v468
          %486 = vmatprep.subr.bf16.mxu0 0
          %487 = vmatpush1.bf16.msra.mxu0 %v469
          %488 = vmatprep.subr.bf16.mxu0 0
          %489 = vmatpush1.bf16.msra.mxu0 %v470
          %490 = vmatprep.subr.bf16.mxu0 0
          %491 = vmatpush1.bf16.msra.mxu0 %v471
          %492 = vmatprep.subr.bf16.mxu0 0
          %493 = vmatpush1.bf16.msra.mxu0 %v472
          %494 = vmatprep.subr.bf16.mxu0 0
          %495 = vmatpush1.bf16.msra.mxu0 %v473
          %496 = vmatprep.subr.bf16.mxu0 0
          %497 = vmatpush1.bf16.msra.mxu0 %v474
          %498 = vmatprep.subr.bf16.mxu0 0
          %499 = vmatpush1.bf16.msra.mxu0 %v475
          %500 = vmatprep.subr.bf16.mxu0 0
          %501 = vmatpush1.bf16.msra.mxu0 0
          %502 = vmatprep.subr.bf16.mxu0 0
          %503 = vmatpush1.bf16.msra.mxu0 0
          %504 = vmatprep.subr.bf16.mxu0 0
          %505 = vmatpush1.bf16.msra.mxu0 0
          %506 = vmatprep.subr.bf16.mxu0 0
          %507 = vmatpush1.bf16.msra.mxu0 0
          %508 = vmatprep.subr.bf16.mxu0 0
          %509 = vmatpush1.bf16.msra.mxu0 0
          %510 = vmatprep.subr.bf16.mxu0 0
          %511 = vmatpush1.bf16.msra.mxu0 0
          %512 = vmatprep.subr.bf16.mxu0 0
          %513 = vmatpush1.bf16.msra.mxu0 0
          %514 = vmatprep.subr.bf16.mxu0 0
          %515 = vmatpush1.bf16.msra.mxu0 0
          %516 = vmatprep.mubr.bf16.mxu0 0
          %517 = vmatmul.mubr.bf16.gmra.mrb[0].mxu0 %v434
          %v518 = vpop.f32.mrb[0].mxu0
          %v519 = vadd.f32 %v428, %v518
          %v520 = vpop.f32.mrb[0].mxu0
          %v521 = vpop.f32.mrb[0].mxu0
          %v522 = vadd.f32 %v428, %v521
          %v523 = vpop.f32.mrb[0].mxu0
          %524 = vdwg.mxu0
          %525 = vst [vmem:[#allocation2] sm:$0xff] %v519
          %526 = vst [vmem:[#allocation2 + $0x8] sm:$0xff] %v522
        $region68: #{tpu_custom_call.1} parent=47 // pred_fallthru
          _
        %p527 = scmp.gt.s32.totalorder %s26, 0
        // Predicated region
        $region69: #{tpu_custom_call.1} parent=47 // pred_check
          %p528 = pneg %p527
        $region70: #{tpu_custom_call.1} parent=47 // pred_check_branch
          %530 = sbr.rel (%p528) target = $region72
        $region71: #{tpu_custom_call.1} parent=47 // pred_region
          %v531 = vld [vmem:[#allocation2] sm:$0xff]
          %v532 = vld [vmem:[#allocation2 + $0x8] sm:$0xff]
          %v533 = vmax.f32 %v531, 0.0
          %v534 = vmax.f32 %v532, 0.0
          %v535 = vpack.c.bf16 %v534, %v533
          %v536 = vld [vmem:[%s350] sm:$0xf]
          %v537 = vld [vmem:[%s350 + $0x4] sm:$0xf]
          %v538 = vld [vmem:[%s350 + $0x8] sm:$0xf]
          %v539 = vld [vmem:[%s350 + $0xc] sm:$0xf]
          %v540 = vld [vmem:[%s350 + $0x10] sm:$0xf]
          %v541 = vld [vmem:[%s350 + $0x14] sm:$0xf]
          %v542 = vld [vmem:[%s350 + $0x18] sm:$0xf]
          %v543 = vld [vmem:[%s350 + $0x1c] sm:$0xf]
          %v544 = vld [vmem:[%s350 + $0x20] sm:$0xf]
          %v545 = vld [vmem:[%s350 + $0x24] sm:$0xf]
          %v546 = vld [vmem:[%s350 + $0x28] sm:$0xf]
          %v547 = vld [vmem:[%s350 + $0x2c] sm:$0xf]
          %v548 = vld [vmem:[%s350 + $0x30] sm:$0xf]
          %v549 = vld [vmem:[%s350 + $0x34] sm:$0xf]
          %v550 = vld [vmem:[%s350 + $0x38] sm:$0xf]
          %v551 = vld [vmem:[%s350 + $0x3c] sm:$0xf]
          %v552 = vld [vmem:[%s395] sm:$0x1]
          %v554 = vlaneseq
          %v555 = vshrl.u32 %v554, 7
          %v556 = vsub.s32 0, %v555
          %v557 = vrot.slane %v552, %v556
          %v575 = vunpack.c.l.b16 %v536
          %v576 = vunpack.c.l.b16 %v537
          %v577 = vunpack.c.l.b16 %v538
          %v578 = vunpack.c.l.b16 %v539
          %v579 = vunpack.c.l.b16 %v540
          %v580 = vunpack.c.l.b16 %v541
          %v581 = vunpack.c.l.b16 %v542
          %v582 = vunpack.c.l.b16 %v543
          %v583 = vunpack.c.l.b16 %v544
          %v584 = vunpack.c.l.b16 %v545
          %v585 = vunpack.c.l.b16 %v546
          %v586 = vunpack.c.l.b16 %v547
          %v587 = vunpack.c.l.b16 %v548
          %v588 = vunpack.c.l.b16 %v549
          %v589 = vunpack.c.l.b16 %v550
          %v590 = vunpack.c.l.b16 %v551
          %v591 = vpack.c.b16 %v576, %v575
          %v592 = vpack.c.b16 %v578, %v577
          %v593 = vpack.c.b16 %v580, %v579
          %v594 = vpack.c.b16 %v582, %v581
          %v595 = vpack.c.b16 %v584, %v583
          %v596 = vpack.c.b16 %v586, %v585
          %v597 = vpack.c.b16 %v588, %v587
          %v598 = vpack.c.b16 %v590, %v589
          %607 = vmatprep.subr.bf16.mxu0 0
          %608 = vmatpush1.bf16.msra.mxu0 %v591
          %609 = vmatprep.subr.bf16.mxu0 0
          %610 = vmatpush1.bf16.msra.mxu0 %v592
          %611 = vmatprep.subr.bf16.mxu0 0
          %612 = vmatpush1.bf16.msra.mxu0 %v593
          %613 = vmatprep.subr.bf16.mxu0 0
          %614 = vmatpush1.bf16.msra.mxu0 %v594
          %615 = vmatprep.subr.bf16.mxu0 0
          %616 = vmatpush1.bf16.msra.mxu0 %v595
          %617 = vmatprep.subr.bf16.mxu0 0
          %618 = vmatpush1.bf16.msra.mxu0 %v596
          %619 = vmatprep.subr.bf16.mxu0 0
          %620 = vmatpush1.bf16.msra.mxu0 %v597
          %621 = vmatprep.subr.bf16.mxu0 0
          %622 = vmatpush1.bf16.msra.mxu0 %v598
          %623 = vmatprep.subr.bf16.mxu0 0
          %624 = vmatpush1.bf16.msra.mxu0 0
          %625 = vmatprep.subr.bf16.mxu0 0
          %626 = vmatpush1.bf16.msra.mxu0 0
          %627 = vmatprep.subr.bf16.mxu0 0
          %628 = vmatpush1.bf16.msra.mxu0 0
          %629 = vmatprep.subr.bf16.mxu0 0
          %630 = vmatpush1.bf16.msra.mxu0 0
          %631 = vmatprep.subr.bf16.mxu0 0
          %632 = vmatpush1.bf16.msra.mxu0 0
          %633 = vmatprep.subr.bf16.mxu0 0
          %634 = vmatpush1.bf16.msra.mxu0 0
          %635 = vmatprep.subr.bf16.mxu0 0
          %636 = vmatpush1.bf16.msra.mxu0 0
          %637 = vmatprep.subr.bf16.mxu0 0
          %638 = vmatpush1.bf16.msra.mxu0 0
          %639 = vmatprep.mubr.bf16.mxu0 0
          %640 = vmatmul.mubr.bf16.gmra.mrb[0].mxu0 %v535
          %v641 = vpop.f32.mrb[0].mxu0
          %v642 = vadd.f32 %v557, %v641
          %v643 = vpop.f32.mrb[0].mxu0
          %v644 = vpop.f32.mrb[0].mxu0
          %v645 = vadd.f32 %v557, %v644
          %v646 = vpop.f32.mrb[0].mxu0
          %647 = vdwg.mxu0
          %648 = vst [vmem:[#allocation2] sm:$0xff] %v642
          %649 = vst [vmem:[#allocation2 + $0x8] sm:$0xff] %v645
        $region72: #{tpu_custom_call.1} parent=47 // pred_fallthru
          _
        %p650 = scmp.eq.s32.totalorder %s26, 2
        // Predicated region
        $region73: #{tpu_custom_call.1} parent=47 // pred_check
          %p651 = pneg %p650
        $region74: #{tpu_custom_call.1} parent=47 // pred_check_branch
          %653 = sbr.rel (%p651) target = $region76
        $region75: #{tpu_custom_call.1} parent=47 // pred_region
          %v654 = vld [vmem:[#allocation2] sm:$0xff]
          %v655 = vld [vmem:[#allocation2 + $0x8] sm:$0xff]
          %v656 = vpack.c.bf16 %v655, %v654
          %v657 = vld [vmem:[#allocation9] sm:$0xf]
          %v658 = vld [vmem:[#allocation9 + $0x4] sm:$0xf]
          %v659 = vld [vmem:[#allocation9 + $0x8] sm:$0xf]
          %v660 = vld [vmem:[#allocation9 + $0xc] sm:$0xf]
          %v661 = vld [vmem:[#allocation9 + $0x10] sm:$0xf]
          %v662 = vld [vmem:[#allocation9 + $0x14] sm:$0xf]
          %v663 = vld [vmem:[#allocation9 + $0x18] sm:$0xf]
          %v664 = vld [vmem:[#allocation9 + $0x1c] sm:$0xf]
          %v665 = vld [vmem:[#allocation9 + $0x20] sm:$0xf]
          %v666 = vld [vmem:[#allocation9 + $0x24] sm:$0xf]
          %v667 = vld [vmem:[#allocation9 + $0x28] sm:$0xf]
          %v668 = vld [vmem:[#allocation9 + $0x2c] sm:$0xf]
          %v669 = vld [vmem:[#allocation9 + $0x30] sm:$0xf]
          %v670 = vld [vmem:[#allocation9 + $0x34] sm:$0xf]
          %v671 = vld [vmem:[#allocation9 + $0x38] sm:$0xf]
          %v672 = vld [vmem:[#allocation9 + $0x3c] sm:$0xf]
          %v673 = vld [vmem:[%s6] sm:$0x1]
          %v675 = vlaneseq
          %v676 = vshrl.u32 %v675, 7
          %v677 = vsub.s32 0, %v676
          %v678 = vrot.slane %v673, %v677
          %v696 = vunpack.c.l.b16 %v657
          %v697 = vunpack.c.l.b16 %v658
          %v698 = vunpack.c.l.b16 %v659
          %v699 = vunpack.c.l.b16 %v660
          %v700 = vunpack.c.l.b16 %v661
          %v701 = vunpack.c.l.b16 %v662
          %v702 = vunpack.c.l.b16 %v663
          %v703 = vunpack.c.l.b16 %v664
          %v704 = vunpack.c.l.b16 %v665
          %v705 = vunpack.c.l.b16 %v666
          %v706 = vunpack.c.l.b16 %v667
          %v707 = vunpack.c.l.b16 %v668
          %v708 = vunpack.c.l.b16 %v669
          %v709 = vunpack.c.l.b16 %v670
          %v710 = vunpack.c.l.b16 %v671
          %v711 = vunpack.c.l.b16 %v672
          %v712 = vpack.c.b16 %v697, %v696
          %v713 = vpack.c.b16 %v699, %v698
          %v714 = vpack.c.b16 %v701, %v700
          %v715 = vpack.c.b16 %v703, %v702
          %v716 = vpack.c.b16 %v705, %v704
          %v717 = vpack.c.b16 %v707, %v706
          %v718 = vpack.c.b16 %v709, %v708
          %v719 = vpack.c.b16 %v711, %v710
          %728 = vmatprep.subr.bf16.mxu0 0
          %729 = vmatpush1.bf16.msra.mxu0 %v712
          %730 = vmatprep.subr.bf16.mxu0 0
          %731 = vmatpush1.bf16.msra.mxu0 %v713
          %732 = vmatprep.subr.bf16.mxu0 0
          %733 = vmatpush1.bf16.msra.mxu0 %v714
          %734 = vmatprep.subr.bf16.mxu0 0
          %735 = vmatpush1.bf16.msra.mxu0 %v715
          %736 = vmatprep.subr.bf16.mxu0 0
          %737 = vmatpush1.bf16.msra.mxu0 %v716
          %738 = vmatprep.subr.bf16.mxu0 0
          %739 = vmatpush1.bf16.msra.mxu0 %v717
          %740 = vmatprep.subr.bf16.mxu0 0
          %741 = vmatpush1.bf16.msra.mxu0 %v718
          %742 = vmatprep.subr.bf16.mxu0 0
          %743 = vmatpush1.bf16.msra.mxu0 %v719
          %744 = vmatprep.subr.bf16.mxu0 0
          %745 = vmatpush1.bf16.msra.mxu0 0
          %746 = vmatprep.subr.bf16.mxu0 0
          %747 = vmatpush1.bf16.msra.mxu0 0
          %748 = vmatprep.subr.bf16.mxu0 0
          %749 = vmatpush1.bf16.msra.mxu0 0
          %750 = vmatprep.subr.bf16.mxu0 0
          %751 = vmatpush1.bf16.msra.mxu0 0
          %752 = vmatprep.subr.bf16.mxu0 0
          %753 = vmatpush1.bf16.msra.mxu0 0
          %754 = vmatprep.subr.bf16.mxu0 0
          %755 = vmatpush1.bf16.msra.mxu0 0
          %756 = vmatprep.subr.bf16.mxu0 0
          %757 = vmatpush1.bf16.msra.mxu0 0
          %758 = vmatprep.subr.bf16.mxu0 0
          %759 = vmatpush1.bf16.msra.mxu0 0
          %760 = vmatprep.mubr.bf16.mxu0 0
          %761 = vmatmul.mubr.bf16.gmra.mrb[0].mxu0 %v656
          %v762 = vpop.f32.mrb[0].mxu0
          %v763 = vadd.f32 %v678, %v762
          %v764 = vpop.f32.mrb[0].mxu0
          %v765 = vpop.f32.mrb[0].mxu0
          %v766 = vadd.f32 %v678, %v765
          %v767 = vpop.f32.mrb[0].mxu0
          %768 = vdwg.mxu0
          %769 = vst [vmem:[#allocation10] sm:$0xff] %v763
          %770 = vst [vmem:[#allocation10 + $0x8] sm:$0xff] %v766
        $region76: #{tpu_custom_call.1} parent=47 // pred_fallthru
          _
        // Predicated region
        $region77: #{tpu_custom_call.1} parent=47 // pred_check
          %p771 = pneg %p225
        $region78: #{tpu_custom_call.1} parent=47 // pred_check_branch
          %773 = sbr.rel (%p771) target = $region80
        $region79: #{tpu_custom_call.1} parent=47 // pred_region
          %s774 = smul.u32 2, %s25
          %s776 = ssub.s32 256, 256
          %777 = vsyncadd [#allocation5], %s776
          %s778 = smul.addr %s774, 128
          %s779 = scalar_lea.hbm %s7, %s778
          %s780 = sshll.u32 [#allocation10], 4
          %s781 = int_to_ptr.vmem [resolvable:$true] %s780
          %786 = dma.vmem_to_hbm [thread:$0]  %s781, 256, %s779, [#allocation5], 128, 128, 8
        $region80: #{tpu_custom_call.1} parent=47 // pred_fallthru
          _
        // Predicated region
        $region81: #{tpu_custom_call.1} parent=47 // pred_check
          %p787 = pneg %p225
        $region82: #{tpu_custom_call.1} parent=47 // pred_check_branch
          %789 = sbr.rel (%p787) target = $region84
        $region83: #{tpu_custom_call.1} parent=47 // pred_region
          %790 = dma.done [#allocation5], 256
        $region84: #{tpu_custom_call.1} parent=47 // pred_fallthru
          _
      $region48: #{tpu_custom_call.1} parent=5 // pred_fallthru
        _
      %p791 = scmp.le.s32.totalorder 2, %s16
      // Predicated region
      $region85: #{tpu_custom_call.1} parent=5 // pred_check
        %p792 = pneg %p791
      $region86: #{tpu_custom_call.1} parent=5 // pred_check_branch
        %794 = sbr.rel (%p792) target = $region88
      $region87: #{tpu_custom_call.1} parent=5 // pred_region
        %s795 = ssub.s32 %s16, 2
      $region88: #{tpu_custom_call.1} parent=5 // pred_fallthru
        _
    $region6: #{tpu_custom_call.1} parent=1 // loop_footer
      %s20 = sadd.s32 1, %s16
    $region7: #{tpu_custom_call.1} parent=1 // loop_footer_branch
      %15 = sbr.rel target = $region3
    $region8: #{tpu_custom_call.1} parent=1 // loop_exit
      _
    %796 = vsyncpa [#allocation4], 1
    %s797 = scalar_lea.sflag [#allocation4], 1
    %798 = vsyncpa %s797, 1
    %799 = vsyncpa [#allocation7], 1
    %800 = vsyncpa [#allocation5], 1
    %s801 = scalar_lea.sflag [#allocation5], 1
    %802 = vsyncpa %s801, 1

// kernel: tpu_custom_call.1
$region0: #{tpu_custom_call.1}
  #allocation0 [shape = 'u32[]', space=smem, size = 0x4, offset = 0x4, fixed_abs, tag = 'smem constant byte address 0x4 - core index']
  #allocation1 [shape = 'u32[144,128]{1,0:T(1,128)}', space=vmem, size = 0x12000, scoped, tag = 'internal scratch']
  #allocation2 [shape = 'f32[16,128]{1,0:T(8,128)}', space=vmem, size = 0x2000, scoped, tag = 'scratch operand']
  %s0 = inlined_call_operand.hbm [shape: bf16[16,128], index: 0, kind: input, shape index: {}]
  %s1 = inlined_call_operand.hbm [shape: bf16[128,128], index: 1, kind: input, shape index: {}]
  %s2 = inlined_call_operand.vmem [shape: f32[1,128], index: 2, kind: input, shape index: {}]
  %s3 = inlined_call_operand.hbm [shape: bf16[2,128,128], index: 3, kind: input, shape index: {}]
  %s4 = inlined_call_operand.vmem [shape: f32[2,1,128], index: 4, kind: input, shape index: {}]
  %s5 = inlined_call_operand.hbm [shape: bf16[128,128], index: 5, kind: input, shape index: {}]
  %s6 = inlined_call_operand.vmem [shape: f32[1,128], index: 6, kind: input, shape index: {}]
  %s7 = inlined_call_operand.hbm [shape: f32[16,128], index: 7, kind: output, shape index: {}]
  %s8 = sld [smem:[#allocation0]]
  $region89: #{tpu_custom_call.1} parent=0
    _
  %s10 = ssub.s32 1, %s8
  %s11 = scalar_select 0, %s10, %s8
  $region1: #{tpu_custom_call.1} parent=0
    #allocation3 [shape = 'u8[4096]{0}', space=vmem, size = 0x1000, scoped, tag = 'input window, operand 0, single buffered']
    #allocation4 [shape = 's32[2]{0}', space=sflag, size = 0x8, scoped, tag = 'scoped memory for tpu_custom_call.1']
    #allocation5 [shape = 's32[2]{0}', space=sflag, size = 0x8, scoped, tag = 'scoped memory for tpu_custom_call.1']
    #allocation6 [shape = 'u8[32768]{0}', space=vmem, size = 0x8000, scoped, tag = 'input window, operand 1, single buffered']
    #allocation7 [shape = 's32[1]{0}', space=sflag, size = 0x4, scoped, tag = 'scoped memory for tpu_custom_call.1']
    #allocation8 [shape = 'u8[65536]{0}', space=vmem, size = 0x10000, scoped, tag = 'input window, operand 3']
    #allocation9 [shape = 'u8[32768]{0}', space=vmem, size = 0x8000, scoped, tag = 'input window, operand 5, single buffered']
    #allocation10 [shape = 'u8[8192]{0}', space=vmem, size = 0x2000, scoped, tag = 'output window, operand 0, single buffered']
    %12 = vsyncpa [#allocation4], 0
    %13 = vsyncpa [#allocation7], 0
    %14 = vsyncpa [#allocation5], 0
    loop: start=0, step=1, limit=5
    $region2: #{tpu_custom_call.1} parent=1 // loop_pre_header
      _
    $region3: #{tpu_custom_call.1} parent=1 // loop_header
      %s16 = sphi 0, %s20
      %p17 = scmp.ge.s32.totalorder %s16, 5
      %s23 = sphi 0, %s35
      %s24 = sphi 0, %s31
      %s25 = sphi 0, %s23
      %s26 = sphi 0, %s24
      %s27 = sphi 0, %s25
      %s28 = sphi 0, %s26
      %s38 = sphi 0, %s40
      %s41 = sphi 0, %s38
      %s42 = sphi 0, %s41
      %s58 = sphi 0, %s42
      %s62 = sphi 0, %s62
      %s64 = sphi 0, %s62
      %s65 = sphi 0, %s64
      %s79 = sphi 0, %s65
      %s83 = sphi 0, %s83
      %s85 = sphi 0, %s83
      %s86 = sphi 0, %s85
      %s100 = sphi 0, %s86
      %s112 = sphi 0, %s114
      %s115 = sphi 0, %s112
      %s116 = sphi 0, %s115
      %s132 = sphi 0, %s116
      %s144 = sphi 0, %s146
      %s147 = sphi 0, %s144
      %s148 = sphi 0, %s147
      %s164 = sphi 0, %s148
      %s168 = sphi 0, %s168
      %s170 = sphi 0, %s168
      %s171 = sphi 0, %s170
      %s185 = sphi 0, %s171
      %s189 = sphi 0, %s189
      %s191 = sphi 0, %s189
      %s192 = sphi 0, %s191
      %s206 = sphi 0, %s192
      %s212 = sphi 0, %s214
      %s215 = sphi 0, %s212
      %s216 = sphi 0, %s215
      %s232 = sphi 0, %s216
    $region4: #{tpu_custom_call.1} parent=1 // loop_header_branch
      %19 = sbr.rel (%p17) target = $region8
    $region5: #{tpu_custom_call.1} parent=1 // loop_body
      %s21 = ssub.s32 %s16, 1
      %s22 = ssub.s32 %s16, 2
      %s29 = sadd.s32 1, %s24
      %p30 = scmp.ge.s32.totalorder %s29, 3
      %s31 = scalar_select %p30, 0, %s29
      %s32 = sadd.s32 1, %s23
      %s33 = scalar_select %p30, %s32, %s23
      %p34 = scmp.ge.s32.totalorder %s33, 1
      %s35 = scalar_select %p34, 0, %s33
      %s36 = ssub.s32 %s23, %s35
      %p37 = scmp.eq.s32.totalorder %s36, 0
      %s39 = sadd.s32 %s38, 1
      %s40 = scalar_select %p37, %s38, %s39
      %p43 = pneg %p37
      %p44 = scmp.eq.s32.totalorder %s16, 2
      %p45 = por %p43, %p44
      %p46 = scmp.ne.s32.totalorder %s38, %s41
      %p47 = scmp.eq.s32.totalorder %s16, 0
      %p48 = por %p46, %p47
      %p49 = scmp.ne.s32.totalorder %s38, %s41
      %p50 = scmp.eq.s32.totalorder %s21, 2
      %p51 = por %p49, %p50
      %p52 = scmp.ne.s32.totalorder %s41, %s42
      %p53 = scmp.eq.s32.totalorder %s21, 0
      %p54 = por %p52, %p53
      %p55 = scmp.ne.s32.totalorder %s41, %s42
      %p56 = scmp.eq.s32.totalorder %s22, 2
      %p57 = por %p55, %p56
      %p59 = scmp.ne.s32.totalorder %s42, %s58
      %p60 = scmp.eq.s32.totalorder %s22, 0
      %p61 = por %p59, %p60
      %s63 = sadd.s32 %s62, 1
      %p66 = scmp.eq.s32.totalorder %s16, 2
      %p67 = scmp.ne.s32.totalorder %s62, %s64
      %p68 = scmp.eq.s32.totalorder %s16, 0
      %p69 = por %p67, %p68
      %p70 = scmp.ne.s32.totalorder %s62, %s64
      %p71 = scmp.eq.s32.totalorder %s21, 2
      %p72 = por %p70, %p71
      %p73 = scmp.ne.s32.totalorder %s64, %s65
      %p74 = scmp.eq.s32.totalorder %s21, 0
      %p75 = por %p73, %p74
      %p76 = scmp.ne.s32.totalorder %s64, %s65
      %p77 = scmp.eq.s32.totalorder %s22, 2
      %p78 = por %p76, %p77
      %p80 = scmp.ne.s32.totalorder %s65, %s79
      %p81 = scmp.eq.s32.totalorder %s22, 0
      %p82 = por %p80, %p81
      %s84 = sadd.s32 %s83, 1
      %p87 = scmp.eq.s32.totalorder %s16, 2
      %p88 = scmp.ne.s32.totalorder %s83, %s85
      %p89 = scmp.eq.s32.totalorder %s16, 0
      %p90 = por %p88, %p89
      %p91 = scmp.ne.s32.totalorder %s83, %s85
      %p92 = scmp.eq.s32.totalorder %s21, 2
      %p93 = por %p91, %p92
      %p94 = scmp.ne.s32.totalorder %s85, %s86
      %p95 = scmp.eq.s32.totalorder %s21, 0
      %p96 = por %p94, %p95
      %p97 = scmp.ne.s32.totalorder %s85, %s86
      %p98 = scmp.eq.s32.totalorder %s22, 2
      %p99 = por %p97, %p98
      %p101 = scmp.ne.s32.totalorder %s86, %s100
      %p102 = scmp.eq.s32.totalorder %s22, 0
      %p103 = por %p101, %p102
      %s104 = ssub.s32 %s24, 1
      %p105 = scmp.gt.s32.totalorder %s104, 0
      %s106 = scalar_select %p105, %s104, 0
      %s107 = ssub.s32 %s31, 1
      %p108 = scmp.gt.s32.totalorder %s107, 0
      %s109 = scalar_select %p108, %s107, 0
      %s110 = ssub.s32 %s106, %s109
      %p111 = scmp.eq.s32.totalorder %s110, 0
      %s113 = sadd.s32 %s112, 1
      %s114 = scalar_select %p111, %s112, %s113
      %p117 = pneg %p111
      %p118 = scmp.eq.s32.totalorder %s16, 2
      %p119 = por %p117, %p118
      %p120 = scmp.ne.s32.totalorder %s112, %s115
      %p121 = scmp.eq.s32.totalorder %s16, 0
      %p122 = por %p120, %p121
      %p123 = scmp.ne.s32.totalorder %s112, %s115
      %p124 = scmp.eq.s32.totalorder %s21, 2
      %p125 = por %p123, %p124
      %p126 = scmp.ne.s32.totalorder %s115, %s116
      %p127 = scmp.eq.s32.totalorder %s21, 0
      %p128 = por %p126, %p127
      %p129 = scmp.ne.s32.totalorder %s115, %s116
      %p130 = scmp.eq.s32.totalorder %s22, 2
      %p131 = por %p129, %p130
      %p133 = scmp.ne.s32.totalorder %s116, %s132
      %p134 = scmp.eq.s32.totalorder %s22, 0
      %p135 = por %p133, %p134
      %s136 = ssub.s32 %s24, 1
      %p137 = scmp.gt.s32.totalorder %s136, 0
      %s138 = scalar_select %p137, %s136, 0
      %s139 = ssub.s32 %s31, 1
      %p140 = scmp.gt.s32.totalorder %s139, 0
      %s141 = scalar_select %p140, %s139, 0
      %s142 = ssub.s32 %s138, %s141
      %p143 = scmp.eq.s32.totalorder %s142, 0
      %s145 = sadd.s32 %s144, 1
      %s146 = scalar_select %p143, %s144, %s145
      %p149 = pneg %p143
      %p150 = scmp.eq.s32.totalorder %s16, 2
      %p151 = por %p149, %p150
      %p152 = scmp.ne.s32.totalorder %s144, %s147
      %p153 = scmp.eq.s32.totalorder %s16, 0
      %p154 = por %p152, %p153
      %p155 = scmp.ne.s32.totalorder %s144, %s147
      %p156 = scmp.eq.s32.totalorder %s21, 2
      %p157 = por %p155, %p156
      %p158 = scmp.ne.s32.totalorder %s147, %s148
      %p159 = scmp.eq.s32.totalorder %s21, 0
      %p160 = por %p158, %p159
      %p161 = scmp.ne.s32.totalorder %s147, %s148
      %p162 = scmp.eq.s32.totalorder %s22, 2
      %p163 = por %p161, %p162
      %p165 = scmp.ne.s32.totalorder %s148, %s164
      %p166 = scmp.eq.s32.totalorder %s22, 0
      %p167 = por %p165, %p166
      %s169 = sadd.s32 %s168, 1
      %p172 = scmp.eq.s32.totalorder %s16, 2
      %p173 = scmp.ne.s32.totalorder %s168, %s170
      %p174 = scmp.eq.s32.totalorder %s16, 0
      %p175 = por %p173, %p174
      %p176 = scmp.ne.s32.totalorder %s168, %s170
      %p177 = scmp.eq.s32.totalorder %s21, 2
      %p178 = por %p176, %p177
      %p179 = scmp.ne.s32.totalorder %s170, %s171
      %p180 = scmp.eq.s32.totalorder %s21, 0
      %p181 = por %p179, %p180
      %p182 = scmp.ne.s32.totalorder %s170, %s171
      %p183 = scmp.eq.s32.totalorder %s22, 2
      %p184 = por %p182, %p183
      %p186 = scmp.ne.s32.totalorder %s171, %s185
      %p187 = scmp.eq.s32.totalorder %s22, 0
      %p188 = por %p186, %p187
      %s190 = sadd.s32 %s189, 1
      %p193 = scmp.eq.s32.totalorder %s16, 2
      %p194 = scmp.ne.s32.totalorder %s189, %s191
      %p195 = scmp.eq.s32.totalorder %s16, 0
      %p196 = por %p194, %p195
      %p197 = scmp.ne.s32.totalorder %s189, %s191
      %p198 = scmp.eq.s32.totalorder %s21, 2
      %p199 = por %p197, %p198
      %p200 = scmp.ne.s32.totalorder %s191, %s192
      %p201 = scmp.eq.s32.totalorder %s21, 0
      %p202 = por %p200, %p201
      %p203 = scmp.ne.s32.totalorder %s191, %s192
      %p204 = scmp.eq.s32.totalorder %s22, 2
      %p205 = por %p203, %p204
      %p207 = scmp.ne.s32.totalorder %s192, %s206
      %p208 = scmp.eq.s32.totalorder %s22, 0
      %p209 = por %p207, %p208
      %s210 = ssub.s32 %s23, %s35
      %p211 = scmp.eq.s32.totalorder %s210, 0
      %s213 = sadd.s32 %s212, 1
      %s214 = scalar_select %p211, %s212, %s213
      %p217 = pneg %p211
      %p218 = scmp.eq.s32.totalorder %s16, 2
      %p219 = por %p217, %p218
      %p220 = scmp.ne.s32.totalorder %s212, %s215
      %p221 = scmp.eq.s32.totalorder %s16, 0
      %p222 = por %p220, %p221
      %p223 = scmp.ne.s32.totalorder %s212, %s215
      %p224 = scmp.eq.s32.totalorder %s21, 2
      %p225 = por %p223, %p224
      %p226 = scmp.ne.s32.totalorder %s215, %s216
      %p227 = scmp.eq.s32.totalorder %s21, 0
      %p228 = por %p226, %p227
      %p229 = scmp.ne.s32.totalorder %s215, %s216
      %p230 = scmp.eq.s32.totalorder %s22, 2
      %p231 = por %p229, %p230
      %p233 = scmp.ne.s32.totalorder %s216, %s232
      %p234 = scmp.eq.s32.totalorder %s22, 0
      %p235 = por %p233, %p234
      %p236 = scmp.le.s32.totalorder 1, %s16
      %p237 = scmp.lt.s32.totalorder %s16, 4
      %p238 = pnand %p236, %p237
      %p239 = pneg %p238
      // Predicated region
      $region9: #{tpu_custom_call.1} parent=5 // pred_check
        _
      $region10: #{tpu_custom_call.1} parent=5 // pred_check_branch
        %241 = sbr.rel (%p238) target = $region12
      $region11: #{tpu_custom_call.1} parent=5 // pred_region
        %s242 = ssub.s32 %s16, 1
        // Predicated region
        $region13: #{tpu_custom_call.1} parent=11 // pred_check
          %p243 = pneg %p54
        $region14: #{tpu_custom_call.1} parent=11 // pred_check_branch
          %245 = sbr.rel (%p243) target = $region16
        $region15: #{tpu_custom_call.1} parent=11 // pred_region
          %s246 = smul.u32 2, %s25
          %s248 = ssub.s32 128, 128
          %249 = vsyncadd [#allocation4], %s248
          %s250 = smul.addr %s246, 64
          %s251 = scalar_lea.hbm %s0, %s250
          %s252 = sshll.u32 [#allocation3], 4
          %s253 = int_to_ptr.vmem [resolvable:$true] %s252
          %258 = dma.hbm_to_vmem [thread:$0]  %s251, 128, %s253, [#allocation4], 64, 64, 4
        $region16: #{tpu_custom_call.1} parent=11 // pred_fallthru
          _
        // Predicated region
        $region17: #{tpu_custom_call.1} parent=11 // pred_check
          %p259 = pneg %p75
        $region18: #{tpu_custom_call.1} parent=11 // pred_check_branch
          %261 = sbr.rel (%p259) target = $region20
        $region19: #{tpu_custom_call.1} parent=11 // pred_region
          %s263 = ssub.s32 1024, 1024
          %264 = vsyncadd [#allocation7], %s263
          %s265 = sshll.u32 [#allocation6], 4
          %s266 = int_to_ptr.vmem [resolvable:$true] %s265
          %271 = dma.hbm_to_vmem [thread:$0]  %s1, 1024, %s266, [#allocation7], 64, 64, 4
        $region20: #{tpu_custom_call.1} parent=11 // pred_fallthru
          _
        // Predicated region
        $region21: #{tpu_custom_call.1} parent=11 // pred_check
          %p272 = pneg %p96
        $region22: #{tpu_custom_call.1} parent=11 // pred_check_branch
          %274 = sbr.rel (%p272) target = $region24
        $region23: #{tpu_custom_call.1} parent=11 // pred_region
          _
        $region24: #{tpu_custom_call.1} parent=11 // pred_fallthru
          _
        // Predicated region
        $region25: #{tpu_custom_call.1} parent=11 // pred_check
          %p275 = pneg %p181
        $region26: #{tpu_custom_call.1} parent=11 // pred_check_branch
          %277 = sbr.rel (%p275) target = $region28
        $region27: #{tpu_custom_call.1} parent=11 // pred_region
          %s279 = ssub.s32 1024, 1024
          %280 = vsyncadd [#allocation7], %s279
          %s281 = sshll.u32 [#allocation9], 4
          %s282 = int_to_ptr.vmem [resolvable:$true] %s281
          %287 = dma.hbm_to_vmem [thread:$0]  %s5, 1024, %s282, [#allocation7], 64, 64, 4
        $region28: #{tpu_custom_call.1} parent=11 // pred_fallthru
          _
        // Predicated region
        $region29: #{tpu_custom_call.1} parent=11 // pred_check
          %p288 = pneg %p202
        $region30: #{tpu_custom_call.1} parent=11 // pred_check_branch
          %290 = sbr.rel (%p288) target = $region32
        $region31: #{tpu_custom_call.1} parent=11 // pred_region
          _
        $region32: #{tpu_custom_call.1} parent=11 // pred_fallthru
          _
      $region12: #{tpu_custom_call.1} parent=5 // pred_fallthru
        _
      %p291 = scmp.lt.s32.totalorder %s16, 3
      // Predicated region
      $region33: #{tpu_custom_call.1} parent=5 // pred_check
        %p292 = pneg %p291
      $region34: #{tpu_custom_call.1} parent=5 // pred_check_branch
        %294 = sbr.rel (%p292) target = $region36
      $region35: #{tpu_custom_call.1} parent=5 // pred_region
        // Predicated region
        $region37: #{tpu_custom_call.1} parent=35 // pred_check
          %p295 = pneg %p122
        $region38: #{tpu_custom_call.1} parent=35 // pred_check_branch
          %297 = sbr.rel (%p295) target = $region40
        $region39: #{tpu_custom_call.1} parent=35 // pred_region
          %s298 = sand.u32 %s16, 1
          %s299 = scalar_lea.sflag [#allocation4], %s298
          %s300 = sand.u32 %s112, 1
          %s301 = smul.addr %s300, 64
          %s302 = scalar_lea.vmem [#allocation8], %s301
          %s303 = ssub.s32 %s24, 1
          %p304 = scmp.gt.s32.totalorder %s303, 0
          %s305 = scalar_select %p304, %s303, 0
          %s307 = ssub.s32 1024, 1024
          %308 = vsyncadd %s299, %s307
          %s309 = smul.addr %s305, 16
          %s310 = smul.addr %s309, 64
          %s311 = scalar_lea.hbm %s3, %s310
          %s312 = sshll.u32 %s302, 4
          %s313 = int_to_ptr.vmem [resolvable:$true] %s312
          %318 = dma.hbm_to_vmem [thread:$0]  %s311, 1024, %s313, %s299, 64, 64, 4
        $region40: #{tpu_custom_call.1} parent=35 // pred_fallthru
          _
        // Predicated region
        $region41: #{tpu_custom_call.1} parent=35 // pred_check
          %p319 = pneg %p154
        $region42: #{tpu_custom_call.1} parent=35 // pred_check_branch
          %321 = sbr.rel (%p319) target = $region44
        $region43: #{tpu_custom_call.1} parent=35 // pred_region
          %s322 = ssub.s32 %s24, 1
          %p323 = scmp.gt.s32.totalorder %s322, 0
          %s324 = scalar_select %p323, %s322, 0
          %p325 = scmp.lt.s32.totalorder %s324, 1
          %s326 = scalar_select %p325, %s324, 1
          %s327 = scalar_lea.vmem %s4, %s326
          %s328 = ssub.s32 %s24, 1
          %p329 = scmp.gt.s32.totalorder %s328, 0
          %s330 = scalar_select %p329, %s328, 0
        $region44: #{tpu_custom_call.1} parent=35 // pred_fallthru
          _
      $region36: #{tpu_custom_call.1} parent=5 // pred_fallthru
        _
      %p331 = scmp.le.s32.totalorder 1, %s16
      %p332 = scmp.lt.s32.totalorder %s16, 4
      %p333 = pnand %p331, %p332
      %p334 = pneg %p333
      // Predicated region
      $region45: #{tpu_custom_call.1} parent=5 // pred_check
        _
      $region46: #{tpu_custom_call.1} parent=5 // pred_check_branch
        %336 = sbr.rel (%p333) target = $region48
      $region47: #{tpu_custom_call.1} parent=5 // pred_region
        %s337 = ssub.s32 %s16, 1
        // Predicated region
        $region49: #{tpu_custom_call.1} parent=47 // pred_check
          %p338 = pneg %p54
        $region50: #{tpu_custom_call.1} parent=47 // pred_check_branch
          %340 = sbr.rel (%p338) target = $region52
        $region51: #{tpu_custom_call.1} parent=47 // pred_region
          %341 = dma.done [#allocation4], 128
        $region52: #{tpu_custom_call.1} parent=47 // pred_fallthru
          _
        // Predicated region
        $region53: #{tpu_custom_call.1} parent=47 // pred_check
          %p342 = pneg %p75
        $region54: #{tpu_custom_call.1} parent=47 // pred_check_branch
          %344 = sbr.rel (%p342) target = $region56
        $region55: #{tpu_custom_call.1} parent=47 // pred_region
          %345 = dma.done [#allocation7], 1024
        $region56: #{tpu_custom_call.1} parent=47 // pred_fallthru
          _
        %s346 = sand.u32 %s21, 1
        %s347 = scalar_lea.sflag [#allocation4], %s346
        %s348 = sand.u32 %s115, 1
        %s349 = smul.addr %s348, 64
        %s350 = scalar_lea.vmem [#allocation8], %s349
        // Predicated region
        $region57: #{tpu_custom_call.1} parent=47 // pred_check
          %p351 = pneg %p128
        $region58: #{tpu_custom_call.1} parent=47 // pred_check_branch
          %353 = sbr.rel (%p351) target = $region60
        $region59: #{tpu_custom_call.1} parent=47 // pred_region
          %354 = dma.done %s347, 1024
        $region60: #{tpu_custom_call.1} parent=47 // pred_fallthru
          _
        // Predicated region
        $region61: #{tpu_custom_call.1} parent=47 // pred_check
          %p355 = pneg %p181
        $region62: #{tpu_custom_call.1} parent=47 // pred_check_branch
          %357 = sbr.rel (%p355) target = $region64
        $region63: #{tpu_custom_call.1} parent=47 // pred_region
          %358 = dma.done [#allocation7], 1024
        $region64: #{tpu_custom_call.1} parent=47 // pred_fallthru
          _
        %p359 = pneg %p54
        %p360 = pneg %p51
        %p361 = pneg %p75
        %p362 = pneg %p72
        %p363 = pneg %p96
        %p364 = pneg %p93
        %s365 = sand.u32 %s21, 1
        %s366 = scalar_lea.sflag [#allocation4], %s365
        %s367 = sand.u32 %s115, 1
        %s368 = smul.addr %s367, 64
        %s369 = scalar_lea.vmem [#allocation8], %s368
        %p370 = pneg %p128
        %p371 = pneg %p125
        %s372 = ssub.s32 %s26, 1
        %p373 = scmp.gt.s32.totalorder %s372, 0
        %s374 = scalar_select %p373, %s372, 0
        %p375 = scmp.lt.s32.totalorder %s374, 1
        %s376 = scalar_select %p375, %s374, 1
        %s377 = scalar_lea.vmem %s4, %s376
        %p378 = pneg %p160
        %p379 = pneg %p157
        %p380 = pneg %p181
        %p381 = pneg %p178
        %p382 = pneg %p202
        %p383 = pneg %p199
        %p384 = pneg %p228
        %p385 = pneg %p225
        %s386 = smul.u32 2, %s25
        %s387 = ssub.s32 %s26, 1
        %p388 = scmp.gt.s32.totalorder %s387, 0
        %s389 = scalar_select %p388, %s387, 0
        %s390 = ssub.s32 %s26, 1
        %p391 = scmp.gt.s32.totalorder %s390, 0
        %s392 = scalar_select %p391, %s390, 0
        %p393 = scmp.lt.s32.totalorder %s392, 1
        %s394 = scalar_select %p393, %s392, 1
        %s395 = scalar_lea.vmem %s4, %s394
        %s396 = ssub.s32 %s26, 1
        %p397 = scmp.gt.s32.totalorder %s396, 0
        %s398 = scalar_select %p397, %s396, 0
        %s399 = smul.u32 2, %s25
        %p401 = scmp.eq.s32.totalorder %s26, 0
        // Predicated region
        $region65: #{tpu_custom_call.1} parent=47 // pred_check
          %p402 = pneg %p401
        $region66: #{tpu_custom_call.1} parent=47 // pred_check_branch
          %404 = sbr.rel (%p402) target = $region68
        $region67: #{tpu_custom_call.1} parent=47 // pred_region
          %v405 = vld [vmem:[#allocation3] sm:$0xf]
          %v406 = vld [vmem:[#allocation3 + $0x4] sm:$0xf]
          %v407 = vld [vmem:[#allocation6] sm:$0xf]
          %v408 = vld [vmem:[#allocation6 + $0x4] sm:$0xf]
          %v409 = vld [vmem:[#allocation6 + $0x8] sm:$0xf]
          %v410 = vld [vmem:[#allocation6 + $0xc] sm:$0xf]
          %v411 = vld [vmem:[#allocation6 + $0x10] sm:$0xf]
          %v412 = vld [vmem:[#allocation6 + $0x14] sm:$0xf]
          %v413 = vld [vmem:[#allocation6 + $0x18] sm:$0xf]
          %v414 = vld [vmem:[#allocation6 + $0x1c] sm:$0xf]
          %v415 = vld [vmem:[#allocation6 + $0x20] sm:$0xf]
          %v416 = vld [vmem:[#allocation6 + $0x24] sm:$0xf]
          %v417 = vld [vmem:[#allocation6 + $0x28] sm:$0xf]
          %v418 = vld [vmem:[#allocation6 + $0x2c] sm:$0xf]
          %v419 = vld [vmem:[#allocation6 + $0x30] sm:$0xf]
          %v420 = vld [vmem:[#allocation6 + $0x34] sm:$0xf]
          %v421 = vld [vmem:[#allocation6 + $0x38] sm:$0xf]
          %v422 = vld [vmem:[#allocation6 + $0x3c] sm:$0xf]
          %v423 = vld [vmem:[%s2] sm:$0x1]
          %v425 = vlaneseq
          %v426 = vshrl.u32 %v425, 7
          %v427 = vsub.s32 0, %v426
          %v428 = vrot.slane %v423, %v427
          %v432 = vunpack.c.l.b16 %v405
          %v433 = vunpack.c.l.b16 %v406
          %v434 = vpack.c.b16 %v433, %v432
          %v452 = vunpack.c.l.b16 %v407
          %v453 = vunpack.c.l.b16 %v408
          %v454 = vunpack.c.l.b16 %v409
          %v455 = vunpack.c.l.b16 %v410
          %v456 = vunpack.c.l.b16 %v411
          %v457 = vunpack.c.l.b16 %v412
          %v458 = vunpack.c.l.b16 %v413
          %v459 = vunpack.c.l.b16 %v414
          %v460 = vunpack.c.l.b16 %v415
          %v461 = vunpack.c.l.b16 %v416
          %v462 = vunpack.c.l.b16 %v417
          %v463 = vunpack.c.l.b16 %v418
          %v464 = vunpack.c.l.b16 %v419
          %v465 = vunpack.c.l.b16 %v420
          %v466 = vunpack.c.l.b16 %v421
          %v467 = vunpack.c.l.b16 %v422
          %v468 = vpack.c.b16 %v453, %v452
          %v469 = vpack.c.b16 %v455, %v454
          %v470 = vpack.c.b16 %v457, %v456
          %v471 = vpack.c.b16 %v459, %v458
          %v472 = vpack.c.b16 %v461, %v460
          %v473 = vpack.c.b16 %v463, %v462
          %v474 = vpack.c.b16 %v465, %v464
          %v475 = vpack.c.b16 %v467, %v466
          %484 = vmatprep.subr.bf16.mxu0 0
          %485 = vmatpush1.bf16.msra.mxu0 %v468
          %486 = vmatprep.subr.bf16.mxu0 0
          %487 = vmatpush1.bf16.msra.mxu0 %v469
          %488 = vmatprep.subr.bf16.mxu0 0
          %489 = vmatpush1.bf16.msra.mxu0 %v470
          %490 = vmatprep.subr.bf16.mxu0 0
          %491 = vmatpush1.bf16.msra.mxu0 %v471
          %492 = vmatprep.subr.bf16.mxu0 0
          %493 = vmatpush1.bf16.msra.mxu0 %v472
          %494 = vmatprep.subr.bf16.mxu0 0
          %495 = vmatpush1.bf16.msra.mxu0 %v473
          %496 = vmatprep.subr.bf16.mxu0 0
          %497 = vmatpush1.bf16.msra.mxu0 %v474
          %498 = vmatprep.subr.bf16.mxu0 0
          %499 = vmatpush1.bf16.msra.mxu0 %v475
          %500 = vmatprep.subr.bf16.mxu0 0
          %501 = vmatpush1.bf16.msra.mxu0 0
          %502 = vmatprep.subr.bf16.mxu0 0
          %503 = vmatpush1.bf16.msra.mxu0 0
          %504 = vmatprep.subr.bf16.mxu0 0
          %505 = vmatpush1.bf16.msra.mxu0 0
          %506 = vmatprep.subr.bf16.mxu0 0
          %507 = vmatpush1.bf16.msra.mxu0 0
          %508 = vmatprep.subr.bf16.mxu0 0
          %509 = vmatpush1.bf16.msra.mxu0 0
          %510 = vmatprep.subr.bf16.mxu0 0
          %511 = vmatpush1.bf16.msra.mxu0 0
          %512 = vmatprep.subr.bf16.mxu0 0
          %513 = vmatpush1.bf16.msra.mxu0 0
          %514 = vmatprep.subr.bf16.mxu0 0
          %515 = vmatpush1.bf16.msra.mxu0 0
          %516 = vmatprep.mubr.bf16.mxu0 0
          %517 = vmatmul.mubr.bf16.gmra.mrb[0].mxu0 %v434
          %v518 = vpop.f32.mrb[0].mxu0
          %v519 = vadd.f32 %v428, %v518
          %v520 = vpop.f32.mrb[0].mxu0
          %v521 = vpop.f32.mrb[0].mxu0
          %v522 = vadd.f32 %v428, %v521
          %v523 = vpop.f32.mrb[0].mxu0
          %524 = vdwg.mxu0
          %525 = vst [vmem:[#allocation2] sm:$0xff] %v519
          %526 = vst [vmem:[#allocation2 + $0x8] sm:$0xff] %v522
        $region68: #{tpu_custom_call.1} parent=47 // pred_fallthru
          _
        %p527 = scmp.gt.s32.totalorder %s26, 0
        // Predicated region
        $region69: #{tpu_custom_call.1} parent=47 // pred_check
          %p528 = pneg %p527
        $region70: #{tpu_custom_call.1} parent=47 // pred_check_branch
          %530 = sbr.rel (%p528) target = $region72
        $region71: #{tpu_custom_call.1} parent=47 // pred_region
          %v531 = vld [vmem:[#allocation2] sm:$0xff]
          %v532 = vld [vmem:[#allocation2 + $0x8] sm:$0xff]
          %v533 = vmax.f32 %v531, 0.0
          %v534 = vmax.f32 %v532, 0.0
          %v535 = vpack.c.bf16 %v534, %v533
          %v536 = vld [vmem:[%s350] sm:$0xf]
          %v537 = vld [vmem:[%s350 + $0x4] sm:$0xf]
          %v538 = vld [vmem:[%s350 + $0x8] sm:$0xf]
          %v539 = vld [vmem:[%s350 + $0xc] sm:$0xf]
          %v540 = vld [vmem:[%s350 + $0x10] sm:$0xf]
          %v541 = vld [vmem:[%s350 + $0x14] sm:$0xf]
          %v542 = vld [vmem:[%s350 + $0x18] sm:$0xf]
          %v543 = vld [vmem:[%s350 + $0x1c] sm:$0xf]
          %v544 = vld [vmem:[%s350 + $0x20] sm:$0xf]
          %v545 = vld [vmem:[%s350 + $0x24] sm:$0xf]
          %v546 = vld [vmem:[%s350 + $0x28] sm:$0xf]
          %v547 = vld [vmem:[%s350 + $0x2c] sm:$0xf]
          %v548 = vld [vmem:[%s350 + $0x30] sm:$0xf]
          %v549 = vld [vmem:[%s350 + $0x34] sm:$0xf]
          %v550 = vld [vmem:[%s350 + $0x38] sm:$0xf]
          %v551 = vld [vmem:[%s350 + $0x3c] sm:$0xf]
          %v552 = vld [vmem:[%s395] sm:$0x1]
          %v554 = vlaneseq
          %v555 = vshrl.u32 %v554, 7
          %v556 = vsub.s32 0, %v555
          %v557 = vrot.slane %v552, %v556
          %v575 = vunpack.c.l.b16 %v536
          %v576 = vunpack.c.l.b16 %v537
          %v577 = vunpack.c.l.b16 %v538
          %v578 = vunpack.c.l.b16 %v539
          %v579 = vunpack.c.l.b16 %v540
          %v580 = vunpack.c.l.b16 %v541
          %v581 = vunpack.c.l.b16 %v542
          %v582 = vunpack.c.l.b16 %v543
          %v583 = vunpack.c.l.b16 %v544
          %v584 = vunpack.c.l.b16 %v545
          %v585 = vunpack.c.l.b16 %v546
          %v586 = vunpack.c.l.b16 %v547
          %v587 = vunpack.c.l.b16 %v548
          %v588 = vunpack.c.l.b16 %v549
          %v589 = vunpack.c.l.b16 %v550
          %v590 = vunpack.c.l.b16 %v551
          %v591 = vpack.c.b16 %v576, %v575
          %v592 = vpack.c.b16 %v578, %v577
          %v593 = vpack.c.b16 %v580, %v579
          %v594 = vpack.c.b16 %v582, %v581
          %v595 = vpack.c.b16 %v584, %v583
          %v596 = vpack.c.b16 %v586, %v585
          %v597 = vpack.c.b16 %v588, %v587
          %v598 = vpack.c.b16 %v590, %v589
          %607 = vmatprep.subr.bf16.mxu0 0
          %608 = vmatpush1.bf16.msra.mxu0 %v591
          %609 = vmatprep.subr.bf16.mxu0 0
          %610 = vmatpush1.bf16.msra.mxu0 %v592
          %611 = vmatprep.subr.bf16.mxu0 0
          %612 = vmatpush1.bf16.msra.mxu0 %v593
          %613 = vmatprep.subr.bf16.mxu0 0
          %614 = vmatpush1.bf16.msra.mxu0 %v594
          %615 = vmatprep.subr.bf16.mxu0 0
          %616 = vmatpush1.bf16.msra.mxu0 %v595
          %617 = vmatprep.subr.bf16.mxu0 0
          %618 = vmatpush1.bf16.msra.mxu0 %v596
          %619 = vmatprep.subr.bf16.mxu0 0
          %620 = vmatpush1.bf16.msra.mxu0 %v597
          %621 = vmatprep.subr.bf16.mxu0 0
          %622 = vmatpush1.bf16.msra.mxu0 %v598
          %623 = vmatprep.subr.bf16.mxu0 0
          %624 = vmatpush1.bf16.msra.mxu0 0
          %625 = vmatprep.subr.bf16.mxu0 0
          %626 = vmatpush1.bf16.msra.mxu0 0
          %627 = vmatprep.subr.bf16.mxu0 0
          %628 = vmatpush1.bf16.msra.mxu0 0
          %629 = vmatprep.subr.bf16.mxu0 0
          %630 = vmatpush1.bf16.msra.mxu0 0
          %631 = vmatprep.subr.bf16.mxu0 0
          %632 = vmatpush1.bf16.msra.mxu0 0
          %633 = vmatprep.subr.bf16.mxu0 0
          %634 = vmatpush1.bf16.msra.mxu0 0
          %635 = vmatprep.subr.bf16.mxu0 0
          %636 = vmatpush1.bf16.msra.mxu0 0
          %637 = vmatprep.subr.bf16.mxu0 0
          %638 = vmatpush1.bf16.msra.mxu0 0
          %639 = vmatprep.mubr.bf16.mxu0 0
          %640 = vmatmul.mubr.bf16.gmra.mrb[0].mxu0 %v535
          %v641 = vpop.f32.mrb[0].mxu0
          %v642 = vadd.f32 %v557, %v641
          %v643 = vpop.f32.mrb[0].mxu0
          %v644 = vpop.f32.mrb[0].mxu0
          %v645 = vadd.f32 %v557, %v644
          %v646 = vpop.f32.mrb[0].mxu0
          %647 = vdwg.mxu0
          %648 = vst [vmem:[#allocation2] sm:$0xff] %v642
          %649 = vst [vmem:[#allocation2 + $0x8] sm:$0xff] %v645
        $region72: #{tpu_custom_call.1} parent=47 // pred_fallthru
          _
        %p650 = scmp.eq.s32.totalorder %s26, 2
        // Predicated region
        $region73: #{tpu_custom_call.1} parent=47 // pred_check
          %p651 = pneg %p650
        $region74: #{tpu_custom_call.1} parent=47 // pred_check_branch
          %653 = sbr.rel (%p651) target = $region76
        $region75: #{tpu_custom_call.1} parent=47 // pred_region
          %v654 = vld [vmem:[#allocation2] sm:$0xff]
          %v655 = vld [vmem:[#allocation2 + $0x8] sm:$0xff]
          %v656 = vpack.c.bf16 %v655, %v654
          %v657 = vld [vmem:[#allocation9] sm:$0xf]
          %v658 = vld [vmem:[#allocation9 + $0x4] sm:$0xf]
          %v659 = vld [vmem:[#allocation9 + $0x8] sm:$0xf]
          %v660 = vld [vmem:[#allocation9 + $0xc] sm:$0xf]
          %v661 = vld [vmem:[#allocation9 + $0x10] sm:$0xf]
          %v662 = vld [vmem:[#allocation9 + $0x14] sm:$0xf]
          %v663 = vld [vmem:[#allocation9 + $0x18] sm:$0xf]
          %v664 = vld [vmem:[#allocation9 + $0x1c] sm:$0xf]
          %v665 = vld [vmem:[#allocation9 + $0x20] sm:$0xf]
          %v666 = vld [vmem:[#allocation9 + $0x24] sm:$0xf]
          %v667 = vld [vmem:[#allocation9 + $0x28] sm:$0xf]
          %v668 = vld [vmem:[#allocation9 + $0x2c] sm:$0xf]
          %v669 = vld [vmem:[#allocation9 + $0x30] sm:$0xf]
          %v670 = vld [vmem:[#allocation9 + $0x34] sm:$0xf]
          %v671 = vld [vmem:[#allocation9 + $0x38] sm:$0xf]
          %v672 = vld [vmem:[#allocation9 + $0x3c] sm:$0xf]
          %v673 = vld [vmem:[%s6] sm:$0x1]
          %v675 = vlaneseq
          %v676 = vshrl.u32 %v675, 7
          %v677 = vsub.s32 0, %v676
          %v678 = vrot.slane %v673, %v677
          %v696 = vunpack.c.l.b16 %v657
          %v697 = vunpack.c.l.b16 %v658
          %v698 = vunpack.c.l.b16 %v659
          %v699 = vunpack.c.l.b16 %v660
          %v700 = vunpack.c.l.b16 %v661
          %v701 = vunpack.c.l.b16 %v662
          %v702 = vunpack.c.l.b16 %v663
          %v703 = vunpack.c.l.b16 %v664
          %v704 = vunpack.c.l.b16 %v665
          %v705 = vunpack.c.l.b16 %v666
          %v706 = vunpack.c.l.b16 %v667
          %v707 = vunpack.c.l.b16 %v668
          %v708 = vunpack.c.l.b16 %v669
          %v709 = vunpack.c.l.b16 %v670
          %v710 = vunpack.c.l.b16 %v671
          %v711 = vunpack.c.l.b16 %v672
          %v712 = vpack.c.b16 %v697, %v696
          %v713 = vpack.c.b16 %v699, %v698
          %v714 = vpack.c.b16 %v701, %v700
          %v715 = vpack.c.b16 %v703, %v702
          %v716 = vpack.c.b16 %v705, %v704
          %v717 = vpack.c.b16 %v707, %v706
          %v718 = vpack.c.b16 %v709, %v708
          %v719 = vpack.c.b16 %v711, %v710
          %728 = vmatprep.subr.bf16.mxu0 0
          %729 = vmatpush1.bf16.msra.mxu0 %v712
          %730 = vmatprep.subr.bf16.mxu0 0
          %731 = vmatpush1.bf16.msra.mxu0 %v713
          %732 = vmatprep.subr.bf16.mxu0 0
          %733 = vmatpush1.bf16.msra.mxu0 %v714
          %734 = vmatprep.subr.bf16.mxu0 0
          %735 = vmatpush1.bf16.msra.mxu0 %v715
          %736 = vmatprep.subr.bf16.mxu0 0
          %737 = vmatpush1.bf16.msra.mxu0 %v716
          %738 = vmatprep.subr.bf16.mxu0 0
          %739 = vmatpush1.bf16.msra.mxu0 %v717
          %740 = vmatprep.subr.bf16.mxu0 0
          %741 = vmatpush1.bf16.msra.mxu0 %v718
          %742 = vmatprep.subr.bf16.mxu0 0
          %743 = vmatpush1.bf16.msra.mxu0 %v719
          %744 = vmatprep.subr.bf16.mxu0 0
          %745 = vmatpush1.bf16.msra.mxu0 0
          %746 = vmatprep.subr.bf16.mxu0 0
          %747 = vmatpush1.bf16.msra.mxu0 0
          %748 = vmatprep.subr.bf16.mxu0 0
          %749 = vmatpush1.bf16.msra.mxu0 0
          %750 = vmatprep.subr.bf16.mxu0 0
          %751 = vmatpush1.bf16.msra.mxu0 0
          %752 = vmatprep.subr.bf16.mxu0 0
          %753 = vmatpush1.bf16.msra.mxu0 0
          %754 = vmatprep.subr.bf16.mxu0 0
          %755 = vmatpush1.bf16.msra.mxu0 0
          %756 = vmatprep.subr.bf16.mxu0 0
          %757 = vmatpush1.bf16.msra.mxu0 0
          %758 = vmatprep.subr.bf16.mxu0 0
          %759 = vmatpush1.bf16.msra.mxu0 0
          %760 = vmatprep.mubr.bf16.mxu0 0
          %761 = vmatmul.mubr.bf16.gmra.mrb[0].mxu0 %v656
          %v762 = vpop.f32.mrb[0].mxu0
          %v763 = vadd.f32 %v678, %v762
          %v764 = vpop.f32.mrb[0].mxu0
          %v765 = vpop.f32.mrb[0].mxu0
          %v766 = vadd.f32 %v678, %v765
          %v767 = vpop.f32.mrb[0].mxu0
          %768 = vdwg.mxu0
          %769 = vst [vmem:[#allocation10] sm:$0xff] %v763
          %770 = vst [vmem:[#allocation10 + $0x8] sm:$0xff] %v766
        $region76: #{tpu_custom_call.1} parent=47 // pred_fallthru
          _
        // Predicated region
        $region77: #{tpu_custom_call.1} parent=47 // pred_check
          %p771 = pneg %p225
        $region78: #{tpu_custom_call.1} parent=47 // pred_check_branch
          %773 = sbr.rel (%p771) target = $region80
        $region79: #{tpu_custom_call.1} parent=47 // pred_region
          %s774 = smul.u32 2, %s25
          %s776 = ssub.s32 256, 256
          %777 = vsyncadd [#allocation5], %s776
          %s778 = smul.addr %s774, 128
          %s779 = scalar_lea.hbm %s7, %s778
          %s780 = sshll.u32 [#allocation10], 4
          %s781 = int_to_ptr.vmem [resolvable:$true] %s780
          %786 = dma.vmem_to_hbm [thread:$0]  %s781, 256, %s779, [#allocation5], 128, 128, 8
        $region80: #{tpu_custom_call.1} parent=47 // pred_fallthru
          _
        // Predicated region
        $region81: #{tpu_custom_call.1} parent=47 // pred_check
          %p787 = pneg %p225
        $region82: #{tpu_custom_call.1} parent=47 // pred_check_branch
          %789 = sbr.rel (%p787) target = $region84
        $region83: #{tpu_custom_call.1} parent=47 // pred_region
          %790 = dma.done [#allocation5], 256
        $region84: #{tpu_custom_call.1} parent=47 // pred_fallthru
          _
      $region48: #{tpu_custom_call.1} parent=5 // pred_fallthru
        _
      %p791 = scmp.le.s32.totalorder 2, %s16
      // Predicated region
      $region85: #{tpu_custom_call.1} parent=5 // pred_check
        %p792 = pneg %p791
      $region86: #{tpu_custom_call.1} parent=5 // pred_check_branch
        %794 = sbr.rel (%p792) target = $region88
      $region87: #{tpu_custom_call.1} parent=5 // pred_region
        %s795 = ssub.s32 %s16, 2
      $region88: #{tpu_custom_call.1} parent=5 // pred_fallthru
        _
    $region6: #{tpu_custom_call.1} parent=1 // loop_footer
      %s20 = sadd.s32 1, %s16
    $region7: #{tpu_custom_call.1} parent=1 // loop_footer_branch
      %15 = sbr.rel target = $region3
    $region8: #{tpu_custom_call.1} parent=1 // loop_exit
      _
    %796 = vsyncpa [#allocation4], 1
    %s797 = scalar_lea.sflag [#allocation4], 1
    %798 = vsyncpa %s797, 1
    %799 = vsyncpa [#allocation7], 1
    %800 = vsyncpa [#allocation5], 1
    %s801 = scalar_lea.sflag [#allocation5], 1
    %802 = vsyncpa %s801, 1

</llo_original>
